<compile_context>
chip_gen: v6e
topology: v6e:2x2x1
jax: 0.10.0
libtpu: 0.0.40
codegen_flags: <defaults>
</compile_context>

<pallas_src>
import functools

import jax
import jax.numpy as jnp
from jax import lax
from jax.experimental import pallas as pl
from jax.experimental.pallas import tpu as pltpu


# ----------------------------------------------------------------------------
# Kernel 1: 3x3 conv (+bias) and per-block BatchNorm statistics, Bt images/step
# ----------------------------------------------------------------------------
def _conv_bias_stats_kernel(xp_ref, m_ref, b_ref, smat_ref, y_ref, st_ref):
    """xp_ref  : (Bt, H+2, (W+2)*Cin) f32   zero-padded NHWC input, cols = (w', ci)
       m_ref   : (3, (W+2)*Cin, W*Cout) bf16 banded conv weights (parity-major cols)
       b_ref   : (1, W*Cout) f32            conv bias tiled over w
       smat_ref: (W*Cout, Cout) f32         0/1 matrix summing columns per channel
       y_ref   : (Bt, H, W*Cout) bf16       conv output (lane-dense, parity-major)
       st_ref  : (1, 2, Cout) f32           per-block channel [sum; sum-of-squares]
    """
    bt, hh, nout = y_ref.shape
    kp = xp_ref.shape[2]

    # Three row taps; the three w taps live inside the banded weight matrix.
    rows = xp_ref[:, 0:hh, :].reshape(bt * hh, kp).astype(jnp.bfloat16)
    acc = jnp.dot(rows, m_ref[0], preferred_element_type=jnp.float32)
    for dh in (1, 2):
        rows = xp_ref[:, dh:dh + hh, :].reshape(bt * hh, kp).astype(jnp.bfloat16)
        acc = acc + jnp.dot(rows, m_ref[dh], preferred_element_type=jnp.float32)

    y = acc + b_ref[...]                                   # (Bt*H, W*Cout) f32
    y_ref[...] = y.reshape(bt, hh, nout).astype(y_ref.dtype)

    # Channel statistics for training-mode BatchNorm, computed from the f32
    # accumulator (before the bf16 store).  One stacked de-interleave matmul.
    ssum = jnp.sum(y, axis=0, keepdims=True)               # (1, W*Cout)
    ssq = jnp.sum(y * y, axis=0, keepdims=True)            # (1, W*Cout)
    both = jnp.concatenate([ssum, ssq], axis=0)            # (2, W*Cout)
    st_ref[...] = jnp.dot(both, smat_ref[...],
                          preferred_element_type=jnp.float32)[None]


# ----------------------------------------------------------------------------
# Kernel 2: fused BatchNorm (stats -> scale/shift in-kernel) + ReLU + 2x2 pool
# ----------------------------------------------------------------------------
def _bn_relu_pool_kernel(st_ref, gb_ref, tmat_ref, y_ref, o_ref, *, inv_n, eps):
    """st_ref  : (G, 2, Cout) f32        per-block channel sums / sums of squares
       gb_ref  : (2, Cout) f32           [gamma; beta]
       tmat_ref: (Cout, 2*W*Cout) f32    0/1 matrix tiling a channel row over lanes
       y_ref   : (Bt, H/2, 2*W*Cout) bf16  conv output; lanes = (h parity, w parity, w2, c)
       o_ref   : (Bt, H/2, (W/2)*Cout) f32 pooled output, lanes = (w2, c)
    """
    # Batch statistics -> folded per-channel scale/shift (tiny, recomputed per step).
    s = jnp.sum(st_ref[...], axis=0)                       # (2, Cout)
    mean = s[0:1, :] * inv_n
    var = jnp.maximum(s[1:2, :] * inv_n - mean * mean, 0.0)
    scale = gb_ref[0:1, :] * lax.rsqrt(var + eps)
    shift = gb_ref[1:2, :] - mean * scale
    ss = jnp.dot(jnp.concatenate([scale, shift], axis=0), tmat_ref[...],
                 preferred_element_type=jnp.float32)       # (2, 2*W*Cout)

    # BN + ReLU on the full 1024-lane rows, then two lane-half maxima:
    #   first half vs second half of 2*W*C  -> pool over h (rows 2k vs 2k+1)
    #   first half vs second half of W*C    -> pool over w (even w vs odd w)
    z = jnp.maximum(y_ref[...].astype(jnp.float32) * ss[0:1] + ss[1:2], 0.0)
    l1 = z.shape[2] // 2
    zh = jnp.maximum(z[..., :l1], z[..., l1:])
    l2 = l1 // 2
    o_ref[...] = jnp.maximum(zh[..., :l2], zh[..., l2:])


# ----------------------------------------------------------------------------
# Wrapper helpers
# ----------------------------------------------------------------------------
def _banded_conv_weights(w, width):
    """(Cout, Cin, 3, 3) -> (3, (W+2)*Cin, W*Cout) banded matrices (one per dh),
    with the output-w axis reordered parity-major (even w first, then odd w)."""
    cout, cin = w.shape[0], w.shape[1]
    wp = jnp.arange(width + 2)                        # padded input column index w'
    wo = jnp.arange(width)                            # output column index w
    dw = wp[:, None] - wo[None, :]                    # (W+2, W); valid taps: 0..2
    valid = (dw >= 0) & (dw <= 2)
    taps = jnp.transpose(w, (2, 3, 1, 0))             # (3, 3, Cin, Cout)
    m = taps[:, jnp.clip(dw, 0, 2)]                   # (3, W+2, W, Cin, Cout)
    m = jnp.where(valid[None, :, :, None, None], m, 0.0)
    order = jnp.concatenate([jnp.arange(0, width, 2), jnp.arange(1, width, 2)])
    m = m[:, :, order, :, :]                          # parity-major output columns
    m = jnp.transpose(m, (0, 1, 3, 2, 4))             # (3, W+2, Cin, W, Cout)
    return m.reshape(3, (width + 2) * cin, width * cout)


def _pick_bt(batch, height, target_rows=256):
    """Batch block: aim for ~target_rows matmul rows; keep >=2 grid steps (v7x
    megacore) only when that does not shrink the MXU M dim below 128."""
    bt = max(1, min(batch, max(1, target_rows // height)))
    while batch % bt:
        bt -= 1
    if batch // bt < 2:
        half = bt // 2
        while half >= 1 and batch % half:
            half -= 1
        if half >= 1 and half * height >= 128:
            bt = half
    return bt


# ----------------------------------------------------------------------------
# Forward
# ----------------------------------------------------------------------------
def down_sample_block(x, w, b, gamma, beta, eps=1e-5):
    """Forward of the PyTorch DownSampleBlock.  x: (B, Cin, H, W) NCHW."""
    B, Cin, H, W = x.shape
    Cout = w.shape[0]
    assert H % 2 == 0 and W % 2 == 0
    bt = _pick_bt(B, H)
    G = B // bt
    Ho, Wo = H // 2, W // 2
    L2 = 2 * W * Cout

    # Boundary layout change (once): NCHW -> padded channels-last, rows flattened.
    xh = jnp.transpose(x, (0, 2, 3, 1))                           # (B, H, W, Cin)
    xp = jnp.pad(xh, ((0, 0), (1, 1), (1, 1), (0, 0)))
    xp = xp.reshape(B, H + 2, (W + 2) * Cin)

    # bf16 MXU operands (f32 accumulation in-kernel); slight numeric delta vs f32.
    m = _banded_conv_weights(w, W).astype(jnp.bfloat16)
    b_row = jnp.tile(b.astype(jnp.float32), W)[None, :]           # (1, W*Cout)
    smat = (jnp.arange(W * Cout)[:, None] % Cout
            == jnp.arange(Cout)[None, :]).astype(jnp.float32)     # (W*Cout, Cout)

    y, stats = pl.pallas_call(
        _conv_bias_stats_kernel,
        out_shape=(
            jax.ShapeDtypeStruct((B, H, W * Cout), jnp.bfloat16),
            jax.ShapeDtypeStruct((G, 2, Cout), jnp.float32),
        ),
        grid=(G,),
        in_specs=[
            pl.BlockSpec((bt, H + 2, (W + 2) * Cin), lambda i: (i, 0, 0)),
            pl.BlockSpec((3, (W + 2) * Cin, W * Cout), lambda i: (0, 0, 0)),
            pl.BlockSpec((1, W * Cout), lambda i: (0, 0)),
            pl.BlockSpec((W * Cout, Cout), lambda i: (0, 0)),
        ],
        out_specs=(
            pl.BlockSpec((bt, H, W * Cout), lambda i: (i, 0, 0)),
            pl.BlockSpec((1, 2, Cout), lambda i: (i, 0, 0)),
        ),
        compiler_params=pltpu.CompilerParams(
            dimension_semantics=("parallel",),
            vmem_limit_bytes=32 * 1024 * 1024),
    )(xp, m, b_row, smat)

    # Free (contiguous) HBM reshape: rows become (h//2,), lanes (h parity, w parity, w2, c).
    y2 = y.reshape(B, Ho, L2)
    gb = jnp.stack([gamma.astype(jnp.float32), beta.astype(jnp.float32)], axis=0)
    tmat = (jnp.arange(L2)[None, :] % Cout
            == jnp.arange(Cout)[:, None]).astype(jnp.float32)     # (Cout, 2*W*Cout)

    out = pl.pallas_call(
        functools.partial(_bn_relu_pool_kernel,
                          inv_n=1.0 / float(B * H * W), eps=float(eps)),
        out_shape=jax.ShapeDtypeStruct((B, Ho, Wo * Cout), jnp.float32),
        grid=(G,),
        in_specs=[
            pl.BlockSpec((G, 2, Cout), lambda i: (0, 0, 0)),
            pl.BlockSpec((2, Cout), lambda i: (0, 0)),
            pl.BlockSpec((Cout, L2), lambda i: (0, 0)),
            pl.BlockSpec((bt, Ho, L2), lambda i: (i, 0, 0)),
        ],
        out_specs=pl.BlockSpec((bt, Ho, Wo * Cout), lambda i: (i, 0, 0)),
        compiler_params=pltpu.CompilerParams(
            dimension_semantics=("parallel",),
            vmem_limit_bytes=32 * 1024 * 1024),
    )(stats, gb, tmat, y2)

    out = out.reshape(B, Ho, Wo, Cout)
    return jnp.transpose(out, (0, 3, 1, 2))                       # back to NCHW


# ----------------------------------------------------------------------------
# Pure-JAX reference (matches the PyTorch module in training mode)
# ----------------------------------------------------------------------------
def _reference(x, w, b, gamma, beta, eps=1e-5):
    y = lax.conv_general_dilated(
        x, w, window_strides=(1, 1), padding=((1, 1), (1, 1)),
        dimension_numbers=("NCHW", "OIHW", "NCHW"),
        precision=lax.Precision.HIGHEST,
    ) + b[None, :, None, None]
    mean = jnp.mean(y, axis=(0, 2, 3), keepdims=True)
    var = jnp.var(y, axis=(0, 2, 3), keepdims=True)
    yn = (y - mean) * lax.rsqrt(var + eps)
    yn = yn * gamma[None, :, None, None] + beta[None, :, None, None]
    r = jnp.maximum(yn, 0.0)
    B, C, H, W = r.shape
    return jnp.max(r.reshape(B, C, H // 2, 2, W // 2, 2), axis=(3, 5))


# ----------------------------------------------------------------------------
# Main
# ----------------------------------------------------------------------------
if __name__ == "__main__":
    B, Cin, H, W, Cout = 2, 4, 16, 16, 32

    key = jax.random.PRNGKey(0)
    kx, kw, kb, kg, kbt = jax.random.split(key, 5)
    x = jax.random.uniform(kx, (B, Cin, H, W), jnp.float32)
    w = 0.1 * jax.random.normal(kw, (Cout, Cin, 3, 3), jnp.float32)
    b = 0.05 * jax.random.normal(kb, (Cout,), jnp.float32)
    gamma = 1.0 + 0.05 * jax.random.normal(kg, (Cout,), jnp.float32)
    beta = 0.05 * jax.random.normal(kbt, (Cout,), jnp.float32)

    fwd = jax.jit(down_sample_block)
    out = fwd(x, w, b, gamma, beta)
    jax.block_until_ready(out)
    assert out.shape == (B, Cout, H // 2, W // 2), out.shape

    ref = _reference(x, w, b, gamma, beta)
    max_err = float(jnp.max(jnp.abs(out - ref)))
    assert jnp.allclose(out, ref, atol=5e-2, rtol=5e-2), f"max abs err {max_err}"

    print("KERNEL_OK")
</pallas_src>

<mosaic_0001>
module attributes {stable_mosaic.version = 11 : i64} {
  func.func @_conv_bias_stats_kernel(%arg0: i32, %arg1: memref<2x18x72xf32, #tpu.memory_space<vmem>>, %arg2: memref<3x72x512xbf16, #tpu.memory_space<vmem>>, %arg3: memref<1x512xf32, #tpu.memory_space<vmem>>, %arg4: memref<512x32xf32, #tpu.memory_space<vmem>>, %arg5: memref<2x16x512xbf16, #tpu.memory_space<vmem>>, %arg6: memref<1x2x32xf32, #tpu.memory_space<vmem>>) attributes {dimension_semantics = [#tpu.dimension_semantics<parallel>], iteration_bounds = array<i64: 1>, scalar_prefetch = 0 : i64, scratch_operands = 0 : i64, tpu.core_type = #tpu.core_type<tc>, window_params = [{transform_indices = @transform_0, window_bounds = array<i64: 2, 18, 72>}, {pipeline_mode = #tpu.pipeline_mode<synchronous>, transform_indices = @transform_1, window_bounds = array<i64: 3, 72, 512>}, {pipeline_mode = #tpu.pipeline_mode<synchronous>, transform_indices = @transform_2, window_bounds = array<i64: 1, 512>}, {pipeline_mode = #tpu.pipeline_mode<synchronous>, transform_indices = @transform_3, window_bounds = array<i64: 512, 32>}, {transform_indices = @transform_4, window_bounds = array<i64: 2, 16, 512>}, {transform_indices = @transform_5, window_bounds = array<i64: 1, 2, 32>}]} {
    %c0 = arith.constant 0 : index
    %c0_0 = arith.constant 0 : index
    %c0_1 = arith.constant 0 : index
    %0 = vector.load %arg1[%c0, %c0_0, %c0_1] : memref<2x18x72xf32, #tpu.memory_space<vmem>>, vector<2x16x72xf32>
    %1 = vector.shape_cast %0 : vector<2x16x72xf32> to vector<32x72xf32>
    %2 = arith.truncf %1 : vector<32x72xf32> to vector<32x72xbf16>
    %c0_2 = arith.constant 0 : index
    %c0_3 = arith.constant 0 : index
    %c0_4 = arith.constant 0 : index
    %3 = vector.load %arg2[%c0_2, %c0_3, %c0_4] : memref<3x72x512xbf16, #tpu.memory_space<vmem>>, vector<1x72x512xbf16>
    %4 = vector.shape_cast %3 : vector<1x72x512xbf16> to vector<72x512xbf16>
    %cst = arith.constant dense<0.000000e+00> : vector<32x512xf32>
    %5 = tpu.matmul %2, %4, %cst {dimension_numbers = #tpu.dot_dimension_numbers<[1], [0], [0], [1], [0, 0, 1, 1], [], []>} : vector<32x72xbf16>, vector<72x512xbf16>, vector<32x512xf32> -> vector<32x512xf32>
    %c0_5 = arith.constant 0 : index
    %c1 = arith.constant 1 : index
    %c0_6 = arith.constant 0 : index
    %6 = vector.load %arg1[%c0_5, %c1, %c0_6] : memref<2x18x72xf32, #tpu.memory_space<vmem>>, vector<2x16x72xf32>
    %7 = vector.shape_cast %6 : vector<2x16x72xf32> to vector<32x72xf32>
    %8 = arith.truncf %7 : vector<32x72xf32> to vector<32x72xbf16>
    %c1_7 = arith.constant 1 : index
    %c0_8 = arith.constant 0 : index
    %c0_9 = arith.constant 0 : index
    %9 = vector.load %arg2[%c1_7, %c0_8, %c0_9] : memref<3x72x512xbf16, #tpu.memory_space<vmem>>, vector<1x72x512xbf16>
    %10 = vector.shape_cast %9 : vector<1x72x512xbf16> to vector<72x512xbf16>
    %cst_10 = arith.constant dense<0.000000e+00> : vector<32x512xf32>
    %11 = tpu.matmul %8, %10, %cst_10 {dimension_numbers = #tpu.dot_dimension_numbers<[1], [0], [0], [1], [0, 0, 1, 1], [], []>} : vector<32x72xbf16>, vector<72x512xbf16>, vector<32x512xf32> -> vector<32x512xf32>
    %12 = arith.addf %5, %11 : vector<32x512xf32>
    %c0_11 = arith.constant 0 : index
    %c2 = arith.constant 2 : index
    %c0_12 = arith.constant 0 : index
    %13 = vector.load %arg1[%c0_11, %c2, %c0_12] : memref<2x18x72xf32, #tpu.memory_space<vmem>>, vector<2x16x72xf32>
    %14 = vector.shape_cast %13 : vector<2x16x72xf32> to vector<32x72xf32>
    %15 = arith.truncf %14 : vector<32x72xf32> to vector<32x72xbf16>
    %c2_13 = arith.constant 2 : index
    %c0_14 = arith.constant 0 : index
    %c0_15 = arith.constant 0 : index
    %16 = vector.load %arg2[%c2_13, %c0_14, %c0_15] : memref<3x72x512xbf16, #tpu.memory_space<vmem>>, vector<1x72x512xbf16>
    %17 = vector.shape_cast %16 : vector<1x72x512xbf16> to vector<72x512xbf16>
    %cst_16 = arith.constant dense<0.000000e+00> : vector<32x512xf32>
    %18 = tpu.matmul %15, %17, %cst_16 {dimension_numbers = #tpu.dot_dimension_numbers<[1], [0], [0], [1], [0, 0, 1, 1], [], []>} : vector<32x72xbf16>, vector<72x512xbf16>, vector<32x512xf32> -> vector<32x512xf32>
    %19 = arith.addf %12, %18 : vector<32x512xf32>
    %c0_17 = arith.constant 0 : index
    %c0_18 = arith.constant 0 : index
    %20 = vector.load %arg3[%c0_17, %c0_18] : memref<1x512xf32, #tpu.memory_space<vmem>>, vector<1x512xf32>
    %21 = vector.broadcast %20 : vector<1x512xf32> to vector<32x512xf32>
    %22 = arith.addf %19, %21 : vector<32x512xf32>
    %23 = vector.shape_cast %22 : vector<32x512xf32> to vector<2x16x512xf32>
    %24 = arith.truncf %23 : vector<2x16x512xf32> to vector<2x16x512xbf16>
    %c0_19 = arith.constant 0 : index
    %c0_20 = arith.constant 0 : index
    %c0_21 = arith.constant 0 : index
    %25 = vector.load %arg5[%c0_19, %c0_20, %c0_21] : memref<2x16x512xbf16, #tpu.memory_space<vmem>>, vector<2x16x512xbf16>
    tpu.vector_store %arg5[%c0_19, %c0_20, %c0_21], %24 {strides = array<i32>} : memref<2x16x512xbf16, #tpu.memory_space<vmem>>, vector<2x16x512xbf16>,
    %cst_22 = arith.constant dense<0.000000e+00> : vector<512xf32>
    %26 = vector.multi_reduction <add>, %22, %cst_22 [0] : vector<32x512xf32> to vector<512xf32>
    %27 = vector.shape_cast %26 : vector<512xf32> to vector<1x512xf32>
    %28 = arith.mulf %22, %22 : vector<32x512xf32>
    %cst_23 = arith.constant dense<0.000000e+00> : vector<512xf32>
    %29 = vector.multi_reduction <add>, %28, %cst_23 [0] : vector<32x512xf32> to vector<512xf32>
    %30 = vector.shape_cast %29 : vector<512xf32> to vector<1x512xf32>
    %31 = tpu.concatenate %27, %30 in 0 : vector<1x512xf32>, vector<1x512xf32> -> vector<2x512xf32>
    %c0_24 = arith.constant 0 : index
    %c0_25 = arith.constant 0 : index
    %32 = vector.load %arg4[%c0_24, %c0_25] : memref<512x32xf32, #tpu.memory_space<vmem>>, vector<512x32xf32>
    %cst_26 = arith.constant dense<0.000000e+00> : vector<2x32xf32>
    %33 = tpu.matmul %31, %32, %cst_26 {dimension_numbers = #tpu.dot_dimension_numbers<[1], [0], [0], [1], [0, 0, 1, 1], [], []>} : vector<2x512xf32>, vector<512x32xf32>, vector<2x32xf32> -> vector<2x32xf32>
    %34 = vector.shape_cast %33 : vector<2x32xf32> to vector<1x2x32xf32>
    %c0_27 = arith.constant 0 : index
    %c0_28 = arith.constant 0 : index
    %c0_29 = arith.constant 0 : index
    %35 = vector.load %arg6[%c0_27, %c0_28, %c0_29] : memref<1x2x32xf32, #tpu.memory_space<vmem>>, vector<1x2x32xf32>
    tpu.vector_store %arg6[%c0_27, %c0_28, %c0_29], %34 {strides = array<i32>} : memref<1x2x32xf32, #tpu.memory_space<vmem>>, vector<1x2x32xf32>,
    return
  }
  func.func @transform_0(%arg0: i32) -> (i32, i32, i32) {
    %c0_i32 = arith.constant 0 : i32
    %c0_i32_0 = arith.constant 0 : i32
    %c0_i32_1 = arith.constant 0 : i32
    return %arg0, %c0_i32, %c0_i32_0 : i32, i32, i32
  }
  func.func @transform_1(%arg0: i32) -> (i32, i32, i32) {
    %c0_i32 = arith.constant 0 : i32
    %c0_i32_0 = arith.constant 0 : i32
    %c0_i32_1 = arith.constant 0 : i32
    %c0_i32_2 = arith.constant 0 : i32
    return %c0_i32, %c0_i32_0, %c0_i32_1 : i32, i32, i32
  }
  func.func @transform_2(%arg0: i32) -> (i32, i32) {
    %c0_i32 = arith.constant 0 : i32
    %c0_i32_0 = arith.constant 0 : i32
    %c0_i32_1 = arith.constant 0 : i32
    return %c0_i32, %c0_i32_0 : i32, i32
  }
  func.func @transform_3(%arg0: i32) -> (i32, i32) {
    %c0_i32 = arith.constant 0 : i32
    %c0_i32_0 = arith.constant 0 : i32
    %c0_i32_1 = arith.constant 0 : i32
    return %c0_i32, %c0_i32_0 : i32, i32
  }
  func.func @transform_4(%arg0: i32) -> (i32, i32, i32) {
    %c0_i32 = arith.constant 0 : i32
    %c0_i32_0 = arith.constant 0 : i32
    %c0_i32_1 = arith.constant 0 : i32
    return %arg0, %c0_i32, %c0_i32_0 : i32, i32, i32
  }
  func.func @transform_5(%arg0: i32) -> (i32, i32, i32) {
    %c0_i32 = arith.constant 0 : i32
    %c0_i32_0 = arith.constant 0 : i32
    %c0_i32_1 = arith.constant 0 : i32
    return %arg0, %c0_i32, %c0_i32_0 : i32, i32, i32
  }
}

module attributes {stable_mosaic.version = 11 : i64} {
  func.func @_bn_relu_pool_kernel(%arg0: i32, %arg1: memref<1x2x32xf32, #tpu.memory_space<vmem>>, %arg2: memref<2x32xf32, #tpu.memory_space<vmem>>, %arg3: memref<32x1024xf32, #tpu.memory_space<vmem>>, %arg4: memref<2x8x1024xbf16, #tpu.memory_space<vmem>>, %arg5: memref<2x8x256xf32, #tpu.memory_space<vmem>>) attributes {dimension_semantics = [#tpu.dimension_semantics<parallel>], iteration_bounds = array<i64: 1>, scalar_prefetch = 0 : i64, scratch_operands = 0 : i64, tpu.core_type = #tpu.core_type<tc>, window_params = [{pipeline_mode = #tpu.pipeline_mode<synchronous>, transform_indices = @transform_0, window_bounds = array<i64: 1, 2, 32>}, {pipeline_mode = #tpu.pipeline_mode<synchronous>, transform_indices = @transform_1, window_bounds = array<i64: 2, 32>}, {pipeline_mode = #tpu.pipeline_mode<synchronous>, transform_indices = @transform_2, window_bounds = array<i64: 32, 1024>}, {transform_indices = @transform_3, window_bounds = array<i64: 2, 8, 1024>}, {transform_indices = @transform_4, window_bounds = array<i64: 2, 8, 256>}]} {
    %c0 = arith.constant 0 : index
    %c0_0 = arith.constant 0 : index
    %c0_1 = arith.constant 0 : index
    %0 = vector.load %arg1[%c0, %c0_0, %c0_1] : memref<1x2x32xf32, #tpu.memory_space<vmem>>, vector<1x2x32xf32>
    %cst = arith.constant dense<0.000000e+00> : vector<2x32xf32>
    %1 = vector.multi_reduction <add>, %0, %cst [0] : vector<1x2x32xf32> to vector<2x32xf32>
    %2 = vector.extract_strided_slice %1 {offsets = [0, 0], sizes = [1, 32], strides = [1, 1]} : vector<2x32xf32> to vector<1x32xf32>
    %cst_2 = arith.constant 0.001953125 : f32
    %3 = vector.broadcast %cst_2 : f32 to vector<1x32xf32>
    %4 = arith.mulf %2, %3 : vector<1x32xf32>
    %5 = vector.extract_strided_slice %1 {offsets = [1, 0], sizes = [1, 32], strides = [1, 1]} : vector<2x32xf32> to vector<1x32xf32>
    %cst_3 = arith.constant 0.001953125 : f32
    %6 = vector.broadcast %cst_3 : f32 to vector<1x32xf32>
    %7 = arith.mulf %5, %6 : vector<1x32xf32>
    %8 = arith.mulf %4, %4 : vector<1x32xf32>
    %9 = arith.subf %7, %8 : vector<1x32xf32>
    %cst_4 = arith.constant 0.000000e+00 : f32
    %10 = vector.broadcast %cst_4 : f32 to vector<1x32xf32>
    %11 = arith.maximumf %9, %10 : vector<1x32xf32>
    %c0_5 = arith.constant 0 : index
    %c0_6 = arith.constant 0 : index
    %12 = vector.load %arg2[%c0_5, %c0_6] : memref<2x32xf32, #tpu.memory_space<vmem>>, vector<1x32xf32>
    %cst_7 = arith.constant 9.99999974E-6 : f32
    %13 = vector.broadcast %cst_7 : f32 to vector<1x32xf32>
    %14 = arith.addf %11, %13 : vector<1x32xf32>
    %15 = math.rsqrt %14 : vector<1x32xf32>
    %16 = arith.mulf %12, %15 : vector<1x32xf32>
    %c1 = arith.constant 1 : index
    %c0_8 = arith.constant 0 : index
    %17 = vector.load %arg2[%c1, %c0_8] : memref<2x32xf32, #tpu.memory_space<vmem>>, vector<1x32xf32>
    %18 = arith.mulf %4, %16 : vector<1x32xf32>
    %19 = arith.subf %17, %18 : vector<1x32xf32>
    %20 = tpu.concatenate %16, %19 in 0 : vector<1x32xf32>, vector<1x32xf32> -> vector<2x32xf32>
    %c0_9 = arith.constant 0 : index
    %c0_10 = arith.constant 0 : index
    %21 = vector.load %arg3[%c0_9, %c0_10] : memref<32x1024xf32, #tpu.memory_space<vmem>>, vector<32x1024xf32>
    %cst_11 = arith.constant dense<0.000000e+00> : vector<2x1024xf32>
    %22 = tpu.matmul %20, %21, %cst_11 {dimension_numbers = #tpu.dot_dimension_numbers<[1], [0], [0], [1], [0, 0, 1, 1], [], []>} : vector<2x32xf32>, vector<32x1024xf32>, vector<2x1024xf32> -> vector<2x1024xf32>
    %c0_12 = arith.constant 0 : index
    %c0_13 = arith.constant 0 : index
    %c0_14 = arith.constant 0 : index
    %23 = vector.load %arg4[%c0_12, %c0_13, %c0_14] : memref<2x8x1024xbf16, #tpu.memory_space<vmem>>, vector<2x8x1024xbf16>
    %24 = arith.extf %23 : vector<2x8x1024xbf16> to vector<2x8x1024xf32>
    %25 = vector.extract_strided_slice %22 {offsets = [0, 0], sizes = [1, 1024], strides = [1, 1]} : vector<2x1024xf32> to vector<1x1024xf32>
    %26 = vector.shape_cast %25 : vector<1x1024xf32> to vector<1x1x1024xf32>
    %27 = vector.broadcast %26 : vector<1x1x1024xf32> to vector<2x8x1024xf32>
    %28 = arith.mulf %24, %27 : vector<2x8x1024xf32>
    %29 = vector.extract_strided_slice %22 {offsets = [1, 0], sizes = [1, 1024], strides = [1, 1]} : vector<2x1024xf32> to vector<1x1024xf32>
    %30 = vector.shape_cast %29 : vector<1x1024xf32> to vector<1x1x1024xf32>
    %31 = vector.broadcast %30 : vector<1x1x1024xf32> to vector<2x8x1024xf32>
    %32 = arith.addf %28, %31 : vector<2x8x1024xf32>
    %cst_15 = arith.constant 0.000000e+00 : f32
    %33 = vector.broadcast %cst_15 : f32 to vector<2x8x1024xf32>
    %34 = arith.maximumf %32, %33 : vector<2x8x1024xf32>
    %35 = vector.extract_strided_slice %34 {offsets = [0, 0, 0], sizes = [2, 8, 512], strides = [1, 1, 1]} : vector<2x8x1024xf32> to vector<2x8x512xf32>
    %36 = vector.extract_strided_slice %34 {offsets = [0, 0, 512], sizes = [2, 8, 512], strides = [1, 1, 1]} : vector<2x8x1024xf32> to vector<2x8x512xf32>
    %37 = arith.maximumf %35, %36 : vector<2x8x512xf32>
    %38 = vector.extract_strided_slice %37 {offsets = [0, 0, 0], sizes = [2, 8, 256], strides = [1, 1, 1]} : vector<2x8x512xf32> to vector<2x8x256xf32>
    %39 = vector.extract_strided_slice %37 {offsets = [0, 0, 256], sizes = [2, 8, 256], strides = [1, 1, 1]} : vector<2x8x512xf32> to vector<2x8x256xf32>
    %40 = arith.maximumf %38, %39 : vector<2x8x256xf32>
    %c0_16 = arith.constant 0 : index
    %c0_17 = arith.constant 0 : index
    %c0_18 = arith.constant 0 : index
    %41 = vector.load %arg5[%c0_16, %c0_17, %c0_18] : memref<2x8x256xf32, #tpu.memory_space<vmem>>, vector<2x8x256xf32>
    tpu.vector_store %arg5[%c0_16, %c0_17, %c0_18], %40 {strides = array<i32>} : memref<2x8x256xf32, #tpu.memory_space<vmem>>, vector<2x8x256xf32>,
    return
  }
  func.func @transform_0(%arg0: i32) -> (i32, i32, i32) {
    %c0_i32 = arith.constant 0 : i32
    %c0_i32_0 = arith.constant 0 : i32
    %c0_i32_1 = arith.constant 0 : i32
    %c0_i32_2 = arith.constant 0 : i32
    return %c0_i32, %c0_i32_0, %c0_i32_1 : i32, i32, i32
  }
  func.func @transform_1(%arg0: i32) -> (i32, i32) {
    %c0_i32 = arith.constant 0 : i32
    %c0_i32_0 = arith.constant 0 : i32
    %c0_i32_1 = arith.constant 0 : i32
    return %c0_i32, %c0_i32_0 : i32, i32
  }
  func.func @transform_2(%arg0: i32) -> (i32, i32) {
    %c0_i32 = arith.constant 0 : i32
    %c0_i32_0 = arith.constant 0 : i32
    %c0_i32_1 = arith.constant 0 : i32
    return %c0_i32, %c0_i32_0 : i32, i32
  }
  func.func @transform_3(%arg0: i32) -> (i32, i32, i32) {
    %c0_i32 = arith.constant 0 : i32
    %c0_i32_0 = arith.constant 0 : i32
    %c0_i32_1 = arith.constant 0 : i32
    return %arg0, %c0_i32, %c0_i32_0 : i32, i32, i32
  }
  func.func @transform_4(%arg0: i32) -> (i32, i32, i32) {
    %c0_i32 = arith.constant 0 : i32
    %c0_i32_0 = arith.constant 0 : i32
    %c0_i32_1 = arith.constant 0 : i32
    return %arg0, %c0_i32, %c0_i32_0 : i32, i32, i32
  }
}

</mosaic_0001>

<llo_original>
// kernel: tile.8
$region0: #{tile.8}
  #allocation0 [shape = 's32[1]{0}', space=sflag, size = 0x4, scoped, tag = 'scoped memory for tile.8']
  %s0 = inlined_call_operand.vmem [shape: f32[32], index: 0, kind: input, shape index: {}]
  %s1 = inlined_call_operand.vmem [shape: f32[16,32], index: 1, kind: output, shape index: {}]
  // Predicated region
  $region2: #{tile.8} parent=0 // pred_check
    _
  $region3: #{tile.8} parent=0 // pred_check_branch
    %3 = sbr.rel (0) target = $region5
  $region4: #{tile.8} parent=0 // pred_region
    _
  $region5: #{tile.8} parent=0 // pred_fallthru
    _
  %v4 = vld [vmem:[%s0] ss:$0 sm:$0xff]
  %5 = vst [vmem:[%s1] sm:$0xff] %v4
  %s6 = scalar_lea.vmem %s1, 8
  %7 = vst [vmem:[%s6] sm:$0xff] %v4

// kernel: tile.9
$region0: #{tile.9}
  %s0 = inlined_call_operand.vmem [shape: f32[16,32], index: 0, kind: input, shape index: {}]
  %s1 = inlined_call_operand.vmem [shape: f32[1,512], index: 1, kind: output, shape index: {}]
  $region1: #{tile.9} parent=0
    #allocation0 [shape = 'u8[16384]{0}', space=vmem, size = 0x4000, scoped, tag = 'scoped mem for output reshape']
    %v2 = vld [vmem:[%s0] ss:$4 sm:$0xf]
    %vm3 = vcmask 261120
    %4 = vst.msk [vmem:[#allocation0] ss:$8 sm:$0xf] %vm3, %v2
    %s5 = scalar_lea.vmem %s0, 3
    %v6 = vld [vmem:[%s5] ss:$4 sm:$0xf]
    %7 = vrot.lane.b32.xlu0 %v6, 96
    %v8 = vpop.permute.xlu0 %7
    %vm9 = vcmask 1048320
    %10 = vst.msk [vmem:[#allocation0] ss:$8 sm:$0xf] %vm9, %v8
    %s11 = scalar_lea.vmem %s0, 2
    %v12 = vld [vmem:[%s11] ss:$4 sm:$0xf]
    %13 = vrot.lane.b32.xlu0 %v12, 64
    %v14 = vpop.permute.xlu0 %13
    %vm15 = vcmask 785920
    %16 = vst.msk [vmem:[#allocation0] ss:$8 sm:$0xf] %vm15, %v14
    %s17 = scalar_lea.vmem %s0, 1
    %v18 = vld [vmem:[%s17] ss:$4 sm:$0xf]
    %19 = vrot.lane.b32.xlu0 %v18, 32
    %v20 = vpop.permute.xlu0 %19
    %vm21 = vcmask 523520
    %22 = vst.msk [vmem:[#allocation0] ss:$8 sm:$0xf] %vm21, %v20
    %s24 = sshll.u32 1, 1
    %s25 = ssub.s32 %s24, 1
    %v27 = vld [vmem:[#allocation0] sm:%s25]
    %s28 = sshll.u32 1, 1
    %s29 = ssub.s32 %s28, 1
    %30 = vst [vmem:[%s1] sm:%s29] %v27
    %s31 = scalar_lea.vmem [#allocation0], 8
    %v32 = vld [vmem:[%s31] sm:%s25]
    %s33 = sshll.u32 1, 1
    %s34 = ssub.s32 %s33, 1
    %s35 = scalar_lea.vmem %s1, 1
    %36 = vst [vmem:[%s35] sm:%s34] %v32
    %s37 = scalar_lea.vmem [#allocation0], 16
    %v38 = vld [vmem:[%s37] sm:%s25]
    %s39 = sshll.u32 1, 1
    %s40 = ssub.s32 %s39, 1
    %s41 = smul.addr 1, 2
    %s42 = scalar_lea.vmem %s1, %s41
    %43 = vst [vmem:[%s42] sm:%s40] %v38
    %s44 = scalar_lea.vmem [#allocation0], 24
    %v45 = vld [vmem:[%s44] sm:%s25]
    %s46 = sshll.u32 1, 1
    %s47 = ssub.s32 %s46, 1
    %s48 = smul.addr 1, 3
    %s49 = scalar_lea.vmem %s1, %s48
    %50 = vst [vmem:[%s49] sm:%s47] %v45

// kernel: down_sample_block.2
$region0: #{down_sample_block.2}
  #allocation0 [shape = 'u32[]', space=smem, size = 0x4, offset = 0x4, fixed_abs, tag = 'smem constant byte address 0x4 - core index']
  #allocation1 [shape = 'u32[144,128]{1,0:T(1,128)}', space=vmem, size = 0x12000, scoped, tag = 'internal scratch']
  %s0 = inlined_call_operand.vmem [shape: f32[2,18,72], index: 0, kind: input, shape index: {}]
  %s1 = inlined_call_operand.vmem [shape: bf16[3,72,512], index: 1, kind: input, shape index: {}]
  %s2 = inlined_call_operand.vmem [shape: f32[1,512], index: 2, kind: input, shape index: {}]
  %s3 = inlined_call_operand.vmem [shape: f32[512,32], index: 3, kind: input, shape index: {}]
  %s4 = inlined_call_operand.vmem [shape: bf16[2,16,512], index: 4, kind: output, shape index: {0}]
  %s5 = inlined_call_operand.vmem [shape: f32[1,2,32], index: 5, kind: output, shape index: {1}]
  %6 = xla_tuple %s4, %s5
  %s7 = sld [smem:[#allocation0]]
  $region34: #{down_sample_block.2} parent=0
    _
  %s9 = ssub.s32 1, %s7
  %s10 = scalar_select 0, %s9, %s7
  // Predicated region
  $region2: #{down_sample_block.2} parent=0 // pred_check
    _
  $region3: #{down_sample_block.2} parent=0 // pred_check_branch
    %12 = sbr.rel (0) target = $region5
  $region4: #{down_sample_block.2} parent=0 // pred_region
    _
  $region5: #{down_sample_block.2} parent=0 // pred_fallthru
    _
  // Predicated region
  $region6: #{down_sample_block.2} parent=0 // pred_check
    _
  $region7: #{down_sample_block.2} parent=0 // pred_check_branch
    %14 = sbr.rel (0) target = $region9
  $region8: #{down_sample_block.2} parent=0 // pred_region
    _
  $region9: #{down_sample_block.2} parent=0 // pred_fallthru
    _
  // Predicated region
  $region10: #{down_sample_block.2} parent=0 // pred_check
    _
  $region11: #{down_sample_block.2} parent=0 // pred_check_branch
    %16 = sbr.rel (0) target = $region13
  $region12: #{down_sample_block.2} parent=0 // pred_region
    _
  $region13: #{down_sample_block.2} parent=0 // pred_fallthru
    _
  // Predicated region
  $region14: #{down_sample_block.2} parent=0 // pred_check
    _
  $region15: #{down_sample_block.2} parent=0 // pred_check_branch
    %18 = sbr.rel (0) target = $region17
  $region16: #{down_sample_block.2} parent=0 // pred_region
    _
  $region17: #{down_sample_block.2} parent=0 // pred_fallthru
    _
  %v20 = vld [vmem:[%s0] sm:$0xff]
  %v21 = vld [vmem:[%s0 + $0x8] sm:$0xff]
  %v22 = vld [vmem:[%s0 + $0x18] sm:$0xff]
  %v23 = vld [vmem:[%s0 + $0x20] sm:$0xff]
  %v24 = vpack.c.bf16 %v21, %v20
  %v25 = vpack.c.bf16 %v23, %v22
  %v26 = vld [vmem:[%s1] sm:$0xff]
  %v27 = vld [vmem:[%s1 + $0x8] sm:$0xff]
  %v28 = vld [vmem:[%s1 + $0x10] sm:$0xff]
  %v29 = vld [vmem:[%s1 + $0x18] sm:$0xff]
  %v30 = vld [vmem:[%s1 + $0x20] sm:$0xff]
  %v31 = vld [vmem:[%s1 + $0x28] sm:$0xff]
  %v32 = vld [vmem:[%s1 + $0x30] sm:$0xff]
  %v33 = vld [vmem:[%s1 + $0x38] sm:$0xff]
  %v34 = vld [vmem:[%s1 + $0x40] sm:$0xff]
  %v35 = vld [vmem:[%s1 + $0x48] sm:$0xff]
  %v36 = vld [vmem:[%s1 + $0x50] sm:$0xff]
  %v37 = vld [vmem:[%s1 + $0x58] sm:$0xff]
  %v38 = vld [vmem:[%s1 + $0x60] sm:$0xff]
  %v39 = vld [vmem:[%s1 + $0x68] sm:$0xff]
  %v40 = vld [vmem:[%s1 + $0x70] sm:$0xff]
  %v41 = vld [vmem:[%s1 + $0x78] sm:$0xff]
  %v42 = vld [vmem:[%s1 + $0x80] sm:$0xff]
  %v43 = vld [vmem:[%s1 + $0x88] sm:$0xff]
  %v44 = vld [vmem:[%s0 + $0x1] sm:$0xff]
  %v45 = vld [vmem:[%s0 + $0x9] sm:$0xff]
  %v46 = vld [vmem:[%s0 + $0x19] sm:$0xff]
  %v47 = vld [vmem:[%s0 + $0x21] sm:$0xff]
  %v48 = vpack.c.bf16 %v45, %v44
  %v49 = vpack.c.bf16 %v47, %v46
  %s50 = scalar_lea.vmem %s1, 144
  %v51 = vld [vmem:[%s50] sm:$0xff]
  %v52 = vld [vmem:[%s50 + $0x8] sm:$0xff]
  %v53 = vld [vmem:[%s50 + $0x10] sm:$0xff]
  %v54 = vld [vmem:[%s50 + $0x18] sm:$0xff]
  %v55 = vld [vmem:[%s50 + $0x20] sm:$0xff]
  %v56 = vld [vmem:[%s50 + $0x28] sm:$0xff]
  %v57 = vld [vmem:[%s50 + $0x30] sm:$0xff]
  %v58 = vld [vmem:[%s50 + $0x38] sm:$0xff]
  %v59 = vld [vmem:[%s50 + $0x40] sm:$0xff]
  %v60 = vld [vmem:[%s50 + $0x48] sm:$0xff]
  %v61 = vld [vmem:[%s50 + $0x50] sm:$0xff]
  %v62 = vld [vmem:[%s50 + $0x58] sm:$0xff]
  %v63 = vld [vmem:[%s50 + $0x60] sm:$0xff]
  %v64 = vld [vmem:[%s50 + $0x68] sm:$0xff]
  %v65 = vld [vmem:[%s50 + $0x70] sm:$0xff]
  %v66 = vld [vmem:[%s50 + $0x78] sm:$0xff]
  %v67 = vld [vmem:[%s50 + $0x80] sm:$0xff]
  %v68 = vld [vmem:[%s50 + $0x88] sm:$0xff]
  %v87 = vunpack.c.l.b16 %v51
  %v88 = vunpack.c.h.b16 %v51
  %v89 = vunpack.c.l.b16 %v52
  %v90 = vunpack.c.h.b16 %v52
  %v91 = vunpack.c.l.b16 %v53
  %v92 = vunpack.c.h.b16 %v53
  %v93 = vunpack.c.l.b16 %v54
  %v94 = vunpack.c.h.b16 %v54
  %v95 = vunpack.c.l.b16 %v55
  %v96 = vunpack.c.h.b16 %v55
  %v97 = vunpack.c.l.b16 %v56
  %v98 = vunpack.c.h.b16 %v56
  %v99 = vunpack.c.l.b16 %v57
  %v100 = vunpack.c.h.b16 %v57
  %v101 = vunpack.c.l.b16 %v58
  %v102 = vunpack.c.h.b16 %v58
  %v103 = vunpack.c.l.b16 %v59
  %v104 = vunpack.c.h.b16 %v59
  %v105 = vunpack.c.l.b16 %v60
  %v106 = vunpack.c.h.b16 %v60
  %v107 = vunpack.c.l.b16 %v61
  %v108 = vunpack.c.h.b16 %v61
  %v109 = vunpack.c.l.b16 %v62
  %v110 = vunpack.c.h.b16 %v62
  %v111 = vunpack.c.l.b16 %v63
  %v112 = vunpack.c.h.b16 %v63
  %v113 = vunpack.c.l.b16 %v64
  %v114 = vunpack.c.h.b16 %v64
  %v115 = vunpack.c.l.b16 %v65
  %v116 = vunpack.c.h.b16 %v65
  %v117 = vunpack.c.l.b16 %v66
  %v118 = vunpack.c.h.b16 %v66
  %v119 = vunpack.c.l.b16 %v67
  %v120 = vunpack.c.h.b16 %v67
  %v121 = vunpack.c.l.b16 %v68
  %v122 = vunpack.c.h.b16 %v68
  %v123 = vpack.c.b16 %v91, %v87
  %v124 = vpack.c.b16 %v92, %v88
  %v125 = vpack.c.b16 %v93, %v89
  %v126 = vpack.c.b16 %v94, %v90
  %v127 = vpack.c.b16 %v99, %v95
  %v128 = vpack.c.b16 %v100, %v96
  %v129 = vpack.c.b16 %v101, %v97
  %v130 = vpack.c.b16 %v102, %v98
  %v131 = vpack.c.b16 %v107, %v103
  %v132 = vpack.c.b16 %v108, %v104
  %v133 = vpack.c.b16 %v109, %v105
  %v134 = vpack.c.b16 %v110, %v106
  %v135 = vpack.c.b16 %v115, %v111
  %v136 = vpack.c.b16 %v116, %v112
  %v137 = vpack.c.b16 %v117, %v113
  %v138 = vpack.c.b16 %v118, %v114
  %v139 = vpack.c.b16 %v119, %v119
  %v140 = vpack.c.b16 %v120, %v120
  %v141 = vpack.c.b16 %v121, %v121
  %v142 = vpack.c.b16 %v122, %v122
  %vm159 = vcmask 588800
  %v161 = vsel %vm159, %v48, 0
  %v164 = vsel %vm159, %v49, 0
  %vm166 = vcmask 1043456
  %v168 = vsel %vm166, %v139, 0
  %v171 = vsel %vm166, %v140, 0
  %v174 = vsel %vm166, %v141, 0
  %v177 = vsel %vm166, %v142, 0
  %179 = vmatprep.subr.bf16.mxu0 0
  %180 = vmatpush1.bf16.msra.mxu0 0
  %181 = vmatprep.subr.bf16.mxu0 0
  %182 = vmatpush1.bf16.msra.mxu0 0
  %183 = vmatprep.subr.bf16.mxu0 0
  %184 = vmatpush1.bf16.msra.mxu0 0
  %185 = vmatprep.subr.bf16.mxu0 %v171
  %186 = vmatpush1.bf16.msra.mxu0 %v168
  %187 = vmatprep.subr.bf16.mxu0 %v136
  %188 = vmatpush1.bf16.msra.mxu0 %v135
  %189 = vmatprep.subr.bf16.mxu0 %v132
  %190 = vmatpush1.bf16.msra.mxu0 %v131
  %191 = vmatprep.subr.bf16.mxu0 %v128
  %192 = vmatpush1.bf16.msra.mxu0 %v127
  %193 = vmatprep.subr.bf16.mxu0 %v124
  %194 = vmatpush1.bf16.msra.mxu0 %v123
  %195 = vmatprep.subr.bf16.mxu0 0
  %196 = vmatpush2.bf16.msra.mxu0 0
  %197 = vmatprep.subr.bf16.mxu0 0
  %198 = vmatpush2.bf16.msra.mxu0 0
  %199 = vmatprep.subr.bf16.mxu0 0
  %200 = vmatpush2.bf16.msra.mxu0 0
  %201 = vmatprep.subr.bf16.mxu0 0
  %202 = vmatpush2.bf16.msra.mxu0 0
  %203 = vmatprep.subr.bf16.mxu0 0
  %204 = vmatpush2.bf16.msra.mxu0 0
  %205 = vmatprep.subr.bf16.mxu0 0
  %206 = vmatpush2.bf16.msra.mxu0 0
  %207 = vmatprep.subr.bf16.mxu0 0
  %208 = vmatpush2.bf16.msra.mxu0 0
  %209 = vmatprep.subr.bf16.mxu0 0
  %210 = vmatpush2.bf16.msra.mxu0 0
  %211 = vmatprep.mubr.bf16.mxu0 0
  %212 = vmatmul.mubr.bf16.gmra.mxu0 %v161
  %v213 = vpop.f32.mrf.mxu0
  %v214 = vadd.f32 0.0, %v213
  %v215 = vpop.f32.mrf.mxu0
  %v216 = vadd.f32 0.0, %v215
  %v217 = vpop.f32.mrf.mxu0
  %v218 = vadd.f32 0.0, %v217
  %v219 = vpop.f32.mrf.mxu0
  %v220 = vadd.f32 0.0, %v219
  %221 = vmatprep.mubr.bf16.mxu0 0
  %222 = vmatmul.mubr.bf16.gmra.mxu0 %v164
  %v223 = vpop.f32.mrf.mxu0
  %v224 = vadd.f32 0.0, %v223
  %v225 = vpop.f32.mrf.mxu0
  %v226 = vadd.f32 0.0, %v225
  %v227 = vpop.f32.mrf.mxu0
  %v228 = vadd.f32 0.0, %v227
  %v229 = vpop.f32.mrf.mxu0
  %v230 = vadd.f32 0.0, %v229
  %231 = vdwg.mxu0
  %232 = vmatprep.subr.bf16.mxu0 0
  %233 = vmatpush1.bf16.msra.mxu0 0
  %234 = vmatprep.subr.bf16.mxu0 0
  %235 = vmatpush1.bf16.msra.mxu0 0
  %236 = vmatprep.subr.bf16.mxu0 0
  %237 = vmatpush1.bf16.msra.mxu0 0
  %238 = vmatprep.subr.bf16.mxu0 %v177
  %239 = vmatpush1.bf16.msra.mxu0 %v174
  %240 = vmatprep.subr.bf16.mxu0 %v138
  %241 = vmatpush1.bf16.msra.mxu0 %v137
  %242 = vmatprep.subr.bf16.mxu0 %v134
  %243 = vmatpush1.bf16.msra.mxu0 %v133
  %244 = vmatprep.subr.bf16.mxu0 %v130
  %245 = vmatpush1.bf16.msra.mxu0 %v129
  %246 = vmatprep.subr.bf16.mxu0 %v126
  %247 = vmatpush1.bf16.msra.mxu0 %v125
  %248 = vmatprep.subr.bf16.mxu0 0
  %249 = vmatpush2.bf16.msra.mxu0 0
  %250 = vmatprep.subr.bf16.mxu0 0
  %251 = vmatpush2.bf16.msra.mxu0 0
  %252 = vmatprep.subr.bf16.mxu0 0
  %253 = vmatpush2.bf16.msra.mxu0 0
  %254 = vmatprep.subr.bf16.mxu0 0
  %255 = vmatpush2.bf16.msra.mxu0 0
  %256 = vmatprep.subr.bf16.mxu0 0
  %257 = vmatpush2.bf16.msra.mxu0 0
  %258 = vmatprep.subr.bf16.mxu0 0
  %259 = vmatpush2.bf16.msra.mxu0 0
  %260 = vmatprep.subr.bf16.mxu0 0
  %261 = vmatpush2.bf16.msra.mxu0 0
  %262 = vmatprep.subr.bf16.mxu0 0
  %263 = vmatpush2.bf16.msra.mxu0 0
  %264 = vmatprep.mubr.bf16.mxu0 0
  %265 = vmatmul.mubr.bf16.gmra.mxu0 %v161
  %v266 = vpop.f32.mrf.mxu0
  %v267 = vadd.f32 0.0, %v266
  %v268 = vpop.f32.mrf.mxu0
  %v269 = vadd.f32 0.0, %v268
  %v270 = vpop.f32.mrf.mxu0
  %v271 = vadd.f32 0.0, %v270
  %v272 = vpop.f32.mrf.mxu0
  %v273 = vadd.f32 0.0, %v272
  %274 = vmatprep.mubr.bf16.mxu0 0
  %275 = vmatmul.mubr.bf16.gmra.mxu0 %v164
  %v276 = vpop.f32.mrf.mxu0
  %v277 = vadd.f32 0.0, %v276
  %v278 = vpop.f32.mrf.mxu0
  %v279 = vadd.f32 0.0, %v278
  %v280 = vpop.f32.mrf.mxu0
  %v281 = vadd.f32 0.0, %v280
  %v282 = vpop.f32.mrf.mxu0
  %v283 = vadd.f32 0.0, %v282
  %284 = vdwg.mxu0
  %v303 = vunpack.c.l.b16 %v26
  %v304 = vunpack.c.h.b16 %v26
  %v305 = vunpack.c.l.b16 %v27
  %v306 = vunpack.c.h.b16 %v27
  %v307 = vunpack.c.l.b16 %v28
  %v308 = vunpack.c.h.b16 %v28
  %v309 = vunpack.c.l.b16 %v29
  %v310 = vunpack.c.h.b16 %v29
  %v311 = vunpack.c.l.b16 %v30
  %v312 = vunpack.c.h.b16 %v30
  %v313 = vunpack.c.l.b16 %v31
  %v314 = vunpack.c.h.b16 %v31
  %v315 = vunpack.c.l.b16 %v32
  %v316 = vunpack.c.h.b16 %v32
  %v317 = vunpack.c.l.b16 %v33
  %v318 = vunpack.c.h.b16 %v33
  %v319 = vunpack.c.l.b16 %v34
  %v320 = vunpack.c.h.b16 %v34
  %v321 = vunpack.c.l.b16 %v35
  %v322 = vunpack.c.h.b16 %v35
  %v323 = vunpack.c.l.b16 %v36
  %v324 = vunpack.c.h.b16 %v36
  %v325 = vunpack.c.l.b16 %v37
  %v326 = vunpack.c.h.b16 %v37
  %v327 = vunpack.c.l.b16 %v38
  %v328 = vunpack.c.h.b16 %v38
  %v329 = vunpack.c.l.b16 %v39
  %v330 = vunpack.c.h.b16 %v39
  %v331 = vunpack.c.l.b16 %v40
  %v332 = vunpack.c.h.b16 %v40
  %v333 = vunpack.c.l.b16 %v41
  %v334 = vunpack.c.h.b16 %v41
  %v335 = vunpack.c.l.b16 %v42
  %v336 = vunpack.c.h.b16 %v42
  %v337 = vunpack.c.l.b16 %v43
  %v338 = vunpack.c.h.b16 %v43
  %v339 = vpack.c.b16 %v307, %v303
  %v340 = vpack.c.b16 %v308, %v304
  %v341 = vpack.c.b16 %v309, %v305
  %v342 = vpack.c.b16 %v310, %v306
  %v343 = vpack.c.b16 %v315, %v311
  %v344 = vpack.c.b16 %v316, %v312
  %v345 = vpack.c.b16 %v317, %v313
  %v346 = vpack.c.b16 %v318, %v314
  %v347 = vpack.c.b16 %v323, %v319
  %v348 = vpack.c.b16 %v324, %v320
  %v349 = vpack.c.b16 %v325, %v321
  %v350 = vpack.c.b16 %v326, %v322
  %v351 = vpack.c.b16 %v331, %v327
  %v352 = vpack.c.b16 %v332, %v328
  %v353 = vpack.c.b16 %v333, %v329
  %v354 = vpack.c.b16 %v334, %v330
  %v355 = vpack.c.b16 %v335, %v335
  %v356 = vpack.c.b16 %v336, %v336
  %v357 = vpack.c.b16 %v337, %v337
  %v358 = vpack.c.b16 %v338, %v338
  %v376 = vsel %vm159, %v24, 0
  %v379 = vsel %vm159, %v25, 0
  %v382 = vsel %vm166, %v355, 0
  %v385 = vsel %vm166, %v356, 0
  %v388 = vsel %vm166, %v357, 0
  %v391 = vsel %vm166, %v358, 0
  %393 = vmatprep.subr.bf16.mxu0 0
  %394 = vmatpush1.bf16.msra.mxu0 0
  %395 = vmatprep.subr.bf16.mxu0 0
  %396 = vmatpush1.bf16.msra.mxu0 0
  %397 = vmatprep.subr.bf16.mxu0 0
  %398 = vmatpush1.bf16.msra.mxu0 0
  %399 = vmatprep.subr.bf16.mxu0 %v385
  %400 = vmatpush1.bf16.msra.mxu0 %v382
  %401 = vmatprep.subr.bf16.mxu0 %v352
  %402 = vmatpush1.bf16.msra.mxu0 %v351
  %403 = vmatprep.subr.bf16.mxu0 %v348
  %404 = vmatpush1.bf16.msra.mxu0 %v347
  %405 = vmatprep.subr.bf16.mxu0 %v344
  %406 = vmatpush1.bf16.msra.mxu0 %v343
  %407 = vmatprep.subr.bf16.mxu0 %v340
  %408 = vmatpush1.bf16.msra.mxu0 %v339
  %409 = vmatprep.subr.bf16.mxu0 0
  %410 = vmatpush2.bf16.msra.mxu0 0
  %411 = vmatprep.subr.bf16.mxu0 0
  %412 = vmatpush2.bf16.msra.mxu0 0
  %413 = vmatprep.subr.bf16.mxu0 0
  %414 = vmatpush2.bf16.msra.mxu0 0
  %415 = vmatprep.subr.bf16.mxu0 0
  %416 = vmatpush2.bf16.msra.mxu0 0
  %417 = vmatprep.subr.bf16.mxu0 0
  %418 = vmatpush2.bf16.msra.mxu0 0
  %419 = vmatprep.subr.bf16.mxu0 0
  %420 = vmatpush2.bf16.msra.mxu0 0
  %421 = vmatprep.subr.bf16.mxu0 0
  %422 = vmatpush2.bf16.msra.mxu0 0
  %423 = vmatprep.subr.bf16.mxu0 0
  %424 = vmatpush2.bf16.msra.mxu0 0
  %425 = vmatprep.mubr.bf16.mxu0 0
  %426 = vmatmul.mubr.bf16.gmra.mxu0 %v376
  %v427 = vpop.f32.mrf.mxu0
  %v428 = vadd.f32 %v214, %v427
  %v429 = vpop.f32.mrf.mxu0
  %v430 = vadd.f32 %v216, %v429
  %v431 = vpop.f32.mrf.mxu0
  %v432 = vadd.f32 %v218, %v431
  %v433 = vpop.f32.mrf.mxu0
  %v434 = vadd.f32 %v220, %v433
  %435 = vmatprep.mubr.bf16.mxu0 0
  %436 = vmatmul.mubr.bf16.gmra.mxu0 %v379
  %v437 = vpop.f32.mrf.mxu0
  %v438 = vadd.f32 %v224, %v437
  %v439 = vpop.f32.mrf.mxu0
  %v440 = vadd.f32 %v226, %v439
  %v441 = vpop.f32.mrf.mxu0
  %v442 = vadd.f32 %v228, %v441
  %v443 = vpop.f32.mrf.mxu0
  %v444 = vadd.f32 %v230, %v443
  %445 = vdwg.mxu0
  %446 = vmatprep.subr.bf16.mxu0 0
  %447 = vmatpush1.bf16.msra.mxu0 0
  %448 = vmatprep.subr.bf16.mxu0 0
  %449 = vmatpush1.bf16.msra.mxu0 0
  %450 = vmatprep.subr.bf16.mxu0 0
  %451 = vmatpush1.bf16.msra.mxu0 0
  %452 = vmatprep.subr.bf16.mxu0 %v391
  %453 = vmatpush1.bf16.msra.mxu0 %v388
  %454 = vmatprep.subr.bf16.mxu0 %v354
  %455 = vmatpush1.bf16.msra.mxu0 %v353
  %456 = vmatprep.subr.bf16.mxu0 %v350
  %457 = vmatpush1.bf16.msra.mxu0 %v349
  %458 = vmatprep.subr.bf16.mxu0 %v346
  %459 = vmatpush1.bf16.msra.mxu0 %v345
  %460 = vmatprep.subr.bf16.mxu0 %v342
  %461 = vmatpush1.bf16.msra.mxu0 %v341
  %462 = vmatprep.subr.bf16.mxu0 0
  %463 = vmatpush2.bf16.msra.mxu0 0
  %464 = vmatprep.subr.bf16.mxu0 0
  %465 = vmatpush2.bf16.msra.mxu0 0
  %466 = vmatprep.subr.bf16.mxu0 0
  %467 = vmatpush2.bf16.msra.mxu0 0
  %468 = vmatprep.subr.bf16.mxu0 0
  %469 = vmatpush2.bf16.msra.mxu0 0
  %470 = vmatprep.subr.bf16.mxu0 0
  %471 = vmatpush2.bf16.msra.mxu0 0
  %472 = vmatprep.subr.bf16.mxu0 0
  %473 = vmatpush2.bf16.msra.mxu0 0
  %474 = vmatprep.subr.bf16.mxu0 0
  %475 = vmatpush2.bf16.msra.mxu0 0
  %476 = vmatprep.subr.bf16.mxu0 0
  %477 = vmatpush2.bf16.msra.mxu0 0
  %478 = vmatprep.mubr.bf16.mxu0 0
  %479 = vmatmul.mubr.bf16.gmra.mxu0 %v376
  %v480 = vpop.f32.mrf.mxu0
  %v481 = vadd.f32 %v267, %v480
  %v482 = vpop.f32.mrf.mxu0
  %v483 = vadd.f32 %v269, %v482
  %v484 = vpop.f32.mrf.mxu0
  %v485 = vadd.f32 %v271, %v484
  %v486 = vpop.f32.mrf.mxu0
  %v487 = vadd.f32 %v273, %v486
  %488 = vmatprep.mubr.bf16.mxu0 0
  %489 = vmatmul.mubr.bf16.gmra.mxu0 %v379
  %v490 = vpop.f32.mrf.mxu0
  %v491 = vadd.f32 %v277, %v490
  %v492 = vpop.f32.mrf.mxu0
  %v493 = vadd.f32 %v279, %v492
  %v494 = vpop.f32.mrf.mxu0
  %v495 = vadd.f32 %v281, %v494
  %v496 = vpop.f32.mrf.mxu0
  %v497 = vadd.f32 %v283, %v496
  %498 = vdwg.mxu0
  %v499 = vld [vmem:[%s0 + $0x2] sm:$0xff]
  %v500 = vld [vmem:[%s0 + $0xa] sm:$0xff]
  %v501 = vld [vmem:[%s0 + $0x1a] sm:$0xff]
  %v502 = vld [vmem:[%s0 + $0x22] sm:$0xff]
  %v503 = vpack.c.bf16 %v500, %v499
  %v504 = vpack.c.bf16 %v502, %v501
  %s505 = scalar_lea.vmem %s1, 288
  %v506 = vld [vmem:[%s505] sm:$0xff]
  %v507 = vld [vmem:[%s505 + $0x8] sm:$0xff]
  %v508 = vld [vmem:[%s505 + $0x10] sm:$0xff]
  %v509 = vld [vmem:[%s505 + $0x18] sm:$0xff]
  %v510 = vld [vmem:[%s505 + $0x20] sm:$0xff]
  %v511 = vld [vmem:[%s505 + $0x28] sm:$0xff]
  %v512 = vld [vmem:[%s505 + $0x30] sm:$0xff]
  %v513 = vld [vmem:[%s505 + $0x38] sm:$0xff]
  %v514 = vld [vmem:[%s505 + $0x40] sm:$0xff]
  %v515 = vld [vmem:[%s505 + $0x48] sm:$0xff]
  %v516 = vld [vmem:[%s505 + $0x50] sm:$0xff]
  %v517 = vld [vmem:[%s505 + $0x58] sm:$0xff]
  %v518 = vld [vmem:[%s505 + $0x60] sm:$0xff]
  %v519 = vld [vmem:[%s505 + $0x68] sm:$0xff]
  %v520 = vld [vmem:[%s505 + $0x70] sm:$0xff]
  %v521 = vld [vmem:[%s505 + $0x78] sm:$0xff]
  %v522 = vld [vmem:[%s505 + $0x80] sm:$0xff]
  %v523 = vld [vmem:[%s505 + $0x88] sm:$0xff]
  %v542 = vunpack.c.l.b16 %v506
  %v543 = vunpack.c.h.b16 %v506
  %v544 = vunpack.c.l.b16 %v507
  %v545 = vunpack.c.h.b16 %v507
  %v546 = vunpack.c.l.b16 %v508
  %v547 = vunpack.c.h.b16 %v508
  %v548 = vunpack.c.l.b16 %v509
  %v549 = vunpack.c.h.b16 %v509
  %v550 = vunpack.c.l.b16 %v510
  %v551 = vunpack.c.h.b16 %v510
  %v552 = vunpack.c.l.b16 %v511
  %v553 = vunpack.c.h.b16 %v511
  %v554 = vunpack.c.l.b16 %v512
  %v555 = vunpack.c.h.b16 %v512
  %v556 = vunpack.c.l.b16 %v513
  %v557 = vunpack.c.h.b16 %v513
  %v558 = vunpack.c.l.b16 %v514
  %v559 = vunpack.c.h.b16 %v514
  %v560 = vunpack.c.l.b16 %v515
  %v561 = vunpack.c.h.b16 %v515
  %v562 = vunpack.c.l.b16 %v516
  %v563 = vunpack.c.h.b16 %v516
  %v564 = vunpack.c.l.b16 %v517
  %v565 = vunpack.c.h.b16 %v517
  %v566 = vunpack.c.l.b16 %v518
  %v567 = vunpack.c.h.b16 %v518
  %v568 = vunpack.c.l.b16 %v519
  %v569 = vunpack.c.h.b16 %v519
  %v570 = vunpack.c.l.b16 %v520
  %v571 = vunpack.c.h.b16 %v520
  %v572 = vunpack.c.l.b16 %v521
  %v573 = vunpack.c.h.b16 %v521
  %v574 = vunpack.c.l.b16 %v522
  %v575 = vunpack.c.h.b16 %v522
  %v576 = vunpack.c.l.b16 %v523
  %v577 = vunpack.c.h.b16 %v523
  %v578 = vpack.c.b16 %v546, %v542
  %v579 = vpack.c.b16 %v547, %v543
  %v580 = vpack.c.b16 %v548, %v544
  %v581 = vpack.c.b16 %v549, %v545
  %v582 = vpack.c.b16 %v554, %v550
  %v583 = vpack.c.b16 %v555, %v551
  %v584 = vpack.c.b16 %v556, %v552
  %v585 = vpack.c.b16 %v557, %v553
  %v586 = vpack.c.b16 %v562, %v558
  %v587 = vpack.c.b16 %v563, %v559
  %v588 = vpack.c.b16 %v564, %v560
  %v589 = vpack.c.b16 %v565, %v561
  %v590 = vpack.c.b16 %v570, %v566
  %v591 = vpack.c.b16 %v571, %v567
  %v592 = vpack.c.b16 %v572, %v568
  %v593 = vpack.c.b16 %v573, %v569
  %v594 = vpack.c.b16 %v574, %v574
  %v595 = vpack.c.b16 %v575, %v575
  %v596 = vpack.c.b16 %v576, %v576
  %v597 = vpack.c.b16 %v577, %v577
  %v615 = vsel %vm159, %v503, 0
  %v618 = vsel %vm159, %v504, 0
  %v621 = vsel %vm166, %v594, 0
  %v624 = vsel %vm166, %v595, 0
  %v627 = vsel %vm166, %v596, 0
  %v630 = vsel %vm166, %v597, 0
  %632 = vmatprep.subr.bf16.mxu0 0
  %633 = vmatpush1.bf16.msra.mxu0 0
  %634 = vmatprep.subr.bf16.mxu0 0
  %635 = vmatpush1.bf16.msra.mxu0 0
  %636 = vmatprep.subr.bf16.mxu0 0
  %637 = vmatpush1.bf16.msra.mxu0 0
  %638 = vmatprep.subr.bf16.mxu0 %v624
  %639 = vmatpush1.bf16.msra.mxu0 %v621
  %640 = vmatprep.subr.bf16.mxu0 %v591
  %641 = vmatpush1.bf16.msra.mxu0 %v590
  %642 = vmatprep.subr.bf16.mxu0 %v587
  %643 = vmatpush1.bf16.msra.mxu0 %v586
  %644 = vmatprep.subr.bf16.mxu0 %v583
  %645 = vmatpush1.bf16.msra.mxu0 %v582
  %646 = vmatprep.subr.bf16.mxu0 %v579
  %647 = vmatpush1.bf16.msra.mxu0 %v578
  %648 = vmatprep.subr.bf16.mxu0 0
  %649 = vmatpush2.bf16.msra.mxu0 0
  %650 = vmatprep.subr.bf16.mxu0 0
  %651 = vmatpush2.bf16.msra.mxu0 0
  %652 = vmatprep.subr.bf16.mxu0 0
  %653 = vmatpush2.bf16.msra.mxu0 0
  %654 = vmatprep.subr.bf16.mxu0 0
  %655 = vmatpush2.bf16.msra.mxu0 0
  %656 = vmatprep.subr.bf16.mxu0 0
  %657 = vmatpush2.bf16.msra.mxu0 0
  %658 = vmatprep.subr.bf16.mxu0 0
  %659 = vmatpush2.bf16.msra.mxu0 0
  %660 = vmatprep.subr.bf16.mxu0 0
  %661 = vmatpush2.bf16.msra.mxu0 0
  %662 = vmatprep.subr.bf16.mxu0 0
  %663 = vmatpush2.bf16.msra.mxu0 0
  %664 = vmatprep.mubr.bf16.mxu0 0
  %665 = vmatmul.mubr.bf16.gmra.mxu0 %v615
  %v666 = vpop.f32.mrf.mxu0
  %v667 = vadd.f32 0.0, %v666
  %v668 = vpop.f32.mrf.mxu0
  %v669 = vadd.f32 0.0, %v668
  %v670 = vpop.f32.mrf.mxu0
  %v671 = vadd.f32 0.0, %v670
  %v672 = vpop.f32.mrf.mxu0
  %v673 = vadd.f32 0.0, %v672
  %674 = vmatprep.mubr.bf16.mxu0 0
  %675 = vmatmul.mubr.bf16.gmra.mxu0 %v618
  %v676 = vpop.f32.mrf.mxu0
  %v677 = vadd.f32 0.0, %v676
  %v678 = vpop.f32.mrf.mxu0
  %v679 = vadd.f32 0.0, %v678
  %v680 = vpop.f32.mrf.mxu0
  %v681 = vadd.f32 0.0, %v680
  %v682 = vpop.f32.mrf.mxu0
  %v683 = vadd.f32 0.0, %v682
  %684 = vdwg.mxu0
  %685 = vmatprep.subr.bf16.mxu0 0
  %686 = vmatpush1.bf16.msra.mxu0 0
  %687 = vmatprep.subr.bf16.mxu0 0
  %688 = vmatpush1.bf16.msra.mxu0 0
  %689 = vmatprep.subr.bf16.mxu0 0
  %690 = vmatpush1.bf16.msra.mxu0 0
  %691 = vmatprep.subr.bf16.mxu0 %v630
  %692 = vmatpush1.bf16.msra.mxu0 %v627
  %693 = vmatprep.subr.bf16.mxu0 %v593
  %694 = vmatpush1.bf16.msra.mxu0 %v592
  %695 = vmatprep.subr.bf16.mxu0 %v589
  %696 = vmatpush1.bf16.msra.mxu0 %v588
  %697 = vmatprep.subr.bf16.mxu0 %v585
  %698 = vmatpush1.bf16.msra.mxu0 %v584
  %699 = vmatprep.subr.bf16.mxu0 %v581
  %700 = vmatpush1.bf16.msra.mxu0 %v580
  %701 = vmatprep.subr.bf16.mxu0 0
  %702 = vmatpush2.bf16.msra.mxu0 0
  %703 = vmatprep.subr.bf16.mxu0 0
  %704 = vmatpush2.bf16.msra.mxu0 0
  %705 = vmatprep.subr.bf16.mxu0 0
  %706 = vmatpush2.bf16.msra.mxu0 0
  %707 = vmatprep.subr.bf16.mxu0 0
  %708 = vmatpush2.bf16.msra.mxu0 0
  %709 = vmatprep.subr.bf16.mxu0 0
  %710 = vmatpush2.bf16.msra.mxu0 0
  %711 = vmatprep.subr.bf16.mxu0 0
  %712 = vmatpush2.bf16.msra.mxu0 0
  %713 = vmatprep.subr.bf16.mxu0 0
  %714 = vmatpush2.bf16.msra.mxu0 0
  %715 = vmatprep.subr.bf16.mxu0 0
  %716 = vmatpush2.bf16.msra.mxu0 0
  %717 = vmatprep.mubr.bf16.mxu0 0
  %718 = vmatmul.mubr.bf16.gmra.mxu0 %v615
  %v719 = vpop.f32.mrf.mxu0
  %v720 = vadd.f32 0.0, %v719
  %v721 = vpop.f32.mrf.mxu0
  %v722 = vadd.f32 0.0, %v721
  %v723 = vpop.f32.mrf.mxu0
  %v724 = vadd.f32 0.0, %v723
  %v725 = vpop.f32.mrf.mxu0
  %v726 = vadd.f32 0.0, %v725
  %727 = vmatprep.mubr.bf16.mxu0 0
  %728 = vmatmul.mubr.bf16.gmra.mxu0 %v618
  %v729 = vpop.f32.mrf.mxu0
  %v730 = vadd.f32 0.0, %v729
  %v731 = vpop.f32.mrf.mxu0
  %v732 = vadd.f32 0.0, %v731
  %v733 = vpop.f32.mrf.mxu0
  %v734 = vadd.f32 0.0, %v733
  %v735 = vpop.f32.mrf.mxu0
  %v736 = vadd.f32 0.0, %v735
  %737 = vdwg.mxu0
  %v738 = vadd.f32 %v428, %v667
  %v739 = vadd.f32 %v430, %v669
  %v740 = vadd.f32 %v481, %v720
  %v741 = vadd.f32 %v483, %v722
  %v742 = vadd.f32 %v432, %v671
  %v743 = vadd.f32 %v434, %v673
  %v744 = vadd.f32 %v485, %v724
  %v745 = vadd.f32 %v487, %v726
  %v746 = vadd.f32 %v438, %v677
  %v747 = vadd.f32 %v440, %v679
  %v748 = vadd.f32 %v491, %v730
  %v749 = vadd.f32 %v493, %v732
  %v750 = vadd.f32 %v442, %v681
  %v751 = vadd.f32 %v444, %v683
  %v752 = vadd.f32 %v495, %v734
  %v753 = vadd.f32 %v497, %v736
  %v754 = vld [vmem:[%s2] sm:$0xf]
  %v756 = vlaneseq
  %v757 = vshrl.u32 %v756, 7
  %v758 = vsub.s32 0, %v757
  %v759 = vrot.slane %v754, %v758
  %v760 = vlaneseq
  %v761 = vshrl.u32 %v760, 7
  %v762 = vsub.s32 1, %v761
  %v763 = vrot.slane %v754, %v762
  %v764 = vlaneseq
  %v765 = vshrl.u32 %v764, 7
  %v766 = vsub.s32 2, %v765
  %v767 = vrot.slane %v754, %v766
  %v768 = vlaneseq
  %v769 = vshrl.u32 %v768, 7
  %v770 = vsub.s32 3, %v769
  %v771 = vrot.slane %v754, %v770
  %v776 = vadd.f32 %v738, %v759
  %v777 = vadd.f32 %v739, %v763
  %v778 = vadd.f32 %v740, %v767
  %v779 = vadd.f32 %v741, %v771
  %v780 = vadd.f32 %v742, %v759
  %v781 = vadd.f32 %v743, %v763
  %v782 = vadd.f32 %v744, %v767
  %v783 = vadd.f32 %v745, %v771
  %v784 = vadd.f32 %v746, %v759
  %v785 = vadd.f32 %v747, %v763
  %v786 = vadd.f32 %v748, %v767
  %v787 = vadd.f32 %v749, %v771
  %v788 = vadd.f32 %v750, %v759
  %v789 = vadd.f32 %v751, %v763
  %v790 = vadd.f32 %v752, %v767
  %v791 = vadd.f32 %v753, %v771
  %v792 = vpack.c.bf16 %v780, %v776
  %v793 = vpack.c.bf16 %v781, %v777
  %v794 = vpack.c.bf16 %v782, %v778
  %v795 = vpack.c.bf16 %v783, %v779
  %v796 = vpack.c.bf16 %v788, %v784
  %v797 = vpack.c.bf16 %v789, %v785
  %v798 = vpack.c.bf16 %v790, %v786
  %v799 = vpack.c.bf16 %v791, %v787
  %v808 = vunpack.c.l.b16 %v792
  %v809 = vunpack.c.l.b16 %v793
  %v810 = vunpack.c.l.b16 %v794
  %v811 = vunpack.c.l.b16 %v795
  %v812 = vunpack.c.h.b16 %v792
  %v813 = vunpack.c.h.b16 %v793
  %v814 = vunpack.c.h.b16 %v794
  %v815 = vunpack.c.h.b16 %v795
  %v816 = vunpack.c.l.b16 %v796
  %v817 = vunpack.c.l.b16 %v797
  %v818 = vunpack.c.l.b16 %v798
  %v819 = vunpack.c.l.b16 %v799
  %v820 = vunpack.c.h.b16 %v796
  %v821 = vunpack.c.h.b16 %v797
  %v822 = vunpack.c.h.b16 %v798
  %v823 = vunpack.c.h.b16 %v799
  %v824 = vpack.c.b16 %v809, %v808
  %v825 = vpack.c.b16 %v811, %v810
  %v826 = vpack.c.b16 %v813, %v812
  %v827 = vpack.c.b16 %v815, %v814
  %v828 = vpack.c.b16 %v817, %v816
  %v829 = vpack.c.b16 %v819, %v818
  %v830 = vpack.c.b16 %v821, %v820
  %v831 = vpack.c.b16 %v823, %v822
  %840 = vst [vmem:[%s4] sm:$0xff] %v824
  %841 = vst [vmem:[%s4 + $0x8] sm:$0xff] %v825
  %842 = vst [vmem:[%s4 + $0x10] sm:$0xff] %v826
  %843 = vst [vmem:[%s4 + $0x18] sm:$0xff] %v827
  %844 = vst [vmem:[%s4 + $0x20] sm:$0xff] %v828
  %845 = vst [vmem:[%s4 + $0x28] sm:$0xff] %v829
  %846 = vst [vmem:[%s4 + $0x30] sm:$0xff] %v830
  %847 = vst [vmem:[%s4 + $0x38] sm:$0xff] %v831
  %v848 = vadd.f32 %v776, %v780
  %v849 = vadd.f32 %v848, %v784
  %v850 = vadd.f32 %v849, %v788
  %v851 = vrot.slane %v850, 4
  %v852 = vadd.f32 %v850, %v851
  %v853 = vrot.slane %v852, 2
  %v854 = vadd.f32 %v852, %v853
  %v855 = vrot.slane %v854, 1
  %v856 = vadd.f32 %v854, %v855
  %v857 = vadd.f32 %v777, %v781
  %v858 = vadd.f32 %v857, %v785
  %v859 = vadd.f32 %v858, %v789
  %v860 = vrot.slane %v859, 4
  %v861 = vadd.f32 %v859, %v860
  %v862 = vrot.slane %v861, 2
  %v863 = vadd.f32 %v861, %v862
  %v864 = vrot.slane %v863, 1
  %v865 = vadd.f32 %v863, %v864
  %v866 = vadd.f32 %v778, %v782
  %v867 = vadd.f32 %v866, %v786
  %v868 = vadd.f32 %v867, %v790
  %v869 = vrot.slane %v868, 4
  %v870 = vadd.f32 %v868, %v869
  %v871 = vrot.slane %v870, 2
  %v872 = vadd.f32 %v870, %v871
  %v873 = vrot.slane %v872, 1
  %v874 = vadd.f32 %v872, %v873
  %v875 = vadd.f32 %v779, %v783
  %v876 = vadd.f32 %v875, %v787
  %v877 = vadd.f32 %v876, %v791
  %v878 = vrot.slane %v877, 4
  %v879 = vadd.f32 %v877, %v878
  %v880 = vrot.slane %v879, 2
  %v881 = vadd.f32 %v879, %v880
  %v882 = vrot.slane %v881, 1
  %v883 = vadd.f32 %v881, %v882
  %v884 = vmul.f32 %v776, %v776
  %v885 = vmul.f32 %v777, %v777
  %v886 = vmul.f32 %v778, %v778
  %v887 = vmul.f32 %v779, %v779
  %v888 = vmul.f32 %v780, %v780
  %v889 = vmul.f32 %v781, %v781
  %v890 = vmul.f32 %v782, %v782
  %v891 = vmul.f32 %v783, %v783
  %v892 = vmul.f32 %v784, %v784
  %v893 = vmul.f32 %v785, %v785
  %v894 = vmul.f32 %v786, %v786
  %v895 = vmul.f32 %v787, %v787
  %v896 = vmul.f32 %v788, %v788
  %v897 = vmul.f32 %v789, %v789
  %v898 = vmul.f32 %v790, %v790
  %v899 = vmul.f32 %v791, %v791
  %v900 = vadd.f32 %v884, %v888
  %v901 = vadd.f32 %v900, %v892
  %v902 = vadd.f32 %v901, %v896
  %v903 = vrot.slane %v902, 4
  %v904 = vadd.f32 %v902, %v903
  %v905 = vrot.slane %v904, 2
  %v906 = vadd.f32 %v904, %v905
  %v907 = vrot.slane %v906, 1
  %v908 = vadd.f32 %v906, %v907
  %v909 = vadd.f32 %v885, %v889
  %v910 = vadd.f32 %v909, %v893
  %v911 = vadd.f32 %v910, %v897
  %v912 = vrot.slane %v911, 4
  %v913 = vadd.f32 %v911, %v912
  %v914 = vrot.slane %v913, 2
  %v915 = vadd.f32 %v913, %v914
  %v916 = vrot.slane %v915, 1
  %v917 = vadd.f32 %v915, %v916
  %v918 = vadd.f32 %v886, %v890
  %v919 = vadd.f32 %v918, %v894
  %v920 = vadd.f32 %v919, %v898
  %v921 = vrot.slane %v920, 4
  %v922 = vadd.f32 %v920, %v921
  %v923 = vrot.slane %v922, 2
  %v924 = vadd.f32 %v922, %v923
  %v925 = vrot.slane %v924, 1
  %v926 = vadd.f32 %v924, %v925
  %v927 = vadd.f32 %v887, %v891
  %v928 = vadd.f32 %v927, %v895
  %v929 = vadd.f32 %v928, %v899
  %v930 = vrot.slane %v929, 4
  %v931 = vadd.f32 %v929, %v930
  %v932 = vrot.slane %v931, 2
  %v933 = vadd.f32 %v931, %v932
  %v934 = vrot.slane %v933, 1
  %v935 = vadd.f32 %v933, %v934
  %vm936 = vcmask 1040384
  %v937 = vsel %vm936, %v856, %v908
  %v938 = vsel %vm936, %v865, %v917
  %v939 = vsel %vm936, %v874, %v926
  %v940 = vsel %vm936, %v883, %v935
  %v941 = vld [vmem:[%s3] sm:$0xff]
  %v942 = vld [vmem:[%s3 + $0x8] sm:$0xff]
  %v943 = vld [vmem:[%s3 + $0x10] sm:$0xff]
  %v944 = vld [vmem:[%s3 + $0x18] sm:$0xff]
  %v945 = vld [vmem:[%s3 + $0x20] sm:$0xff]
  %v946 = vld [vmem:[%s3 + $0x28] sm:$0xff]
  %v947 = vld [vmem:[%s3 + $0x30] sm:$0xff]
  %v948 = vld [vmem:[%s3 + $0x38] sm:$0xff]
  %v949 = vld [vmem:[%s3 + $0x40] sm:$0xff]
  %v950 = vld [vmem:[%s3 + $0x48] sm:$0xff]
  %v951 = vld [vmem:[%s3 + $0x50] sm:$0xff]
  %v952 = vld [vmem:[%s3 + $0x58] sm:$0xff]
  %v953 = vld [vmem:[%s3 + $0x60] sm:$0xff]
  %v954 = vld [vmem:[%s3 + $0x68] sm:$0xff]
  %v955 = vld [vmem:[%s3 + $0x70] sm:$0xff]
  %v956 = vld [vmem:[%s3 + $0x78] sm:$0xff]
  %v957 = vld [vmem:[%s3 + $0x80] sm:$0xff]
  %v958 = vld [vmem:[%s3 + $0x88] sm:$0xff]
  %v959 = vld [vmem:[%s3 + $0x90] sm:$0xff]
  %v960 = vld [vmem:[%s3 + $0x98] sm:$0xff]
  %v961 = vld [vmem:[%s3 + $0xa0] sm:$0xff]
  %v962 = vld [vmem:[%s3 + $0xa8] sm:$0xff]
  %v963 = vld [vmem:[%s3 + $0xb0] sm:$0xff]
  %v964 = vld [vmem:[%s3 + $0xb8] sm:$0xff]
  %v965 = vld [vmem:[%s3 + $0xc0] sm:$0xff]
  %v966 = vld [vmem:[%s3 + $0xc8] sm:$0xff]
  %v967 = vld [vmem:[%s3 + $0xd0] sm:$0xff]
  %v968 = vld [vmem:[%s3 + $0xd8] sm:$0xff]
  %v969 = vld [vmem:[%s3 + $0xe0] sm:$0xff]
  %v970 = vld [vmem:[%s3 + $0xe8] sm:$0xff]
  %v971 = vld [vmem:[%s3 + $0xf0] sm:$0xff]
  %v972 = vld [vmem:[%s3 + $0xf8] sm:$0xff]
  %v973 = vld [vmem:[%s3 + $0x100] sm:$0xff]
  %v974 = vld [vmem:[%s3 + $0x108] sm:$0xff]
  %v975 = vld [vmem:[%s3 + $0x110] sm:$0xff]
  %v976 = vld [vmem:[%s3 + $0x118] sm:$0xff]
  %v977 = vld [vmem:[%s3 + $0x120] sm:$0xff]
  %v978 = vld [vmem:[%s3 + $0x128] sm:$0xff]
  %v979 = vld [vmem:[%s3 + $0x130] sm:$0xff]
  %v980 = vld [vmem:[%s3 + $0x138] sm:$0xff]
  %v981 = vld [vmem:[%s3 + $0x140] sm:$0xff]
  %v982 = vld [vmem:[%s3 + $0x148] sm:$0xff]
  %v983 = vld [vmem:[%s3 + $0x150] sm:$0xff]
  %v984 = vld [vmem:[%s3 + $0x158] sm:$0xff]
  %v985 = vld [vmem:[%s3 + $0x160] sm:$0xff]
  %v986 = vld [vmem:[%s3 + $0x168] sm:$0xff]
  %v987 = vld [vmem:[%s3 + $0x170] sm:$0xff]
  %v988 = vld [vmem:[%s3 + $0x178] sm:$0xff]
  %v989 = vld [vmem:[%s3 + $0x180] sm:$0xff]
  %v990 = vld [vmem:[%s3 + $0x188] sm:$0xff]
  %v991 = vld [vmem:[%s3 + $0x190] sm:$0xff]
  %v992 = vld [vmem:[%s3 + $0x198] sm:$0xff]
  %v993 = vld [vmem:[%s3 + $0x1a0] sm:$0xff]
  %v994 = vld [vmem:[%s3 + $0x1a8] sm:$0xff]
  %v995 = vld [vmem:[%s3 + $0x1b0] sm:$0xff]
  %v996 = vld [vmem:[%s3 + $0x1b8] sm:$0xff]
  %v997 = vld [vmem:[%s3 + $0x1c0] sm:$0xff]
  %v998 = vld [vmem:[%s3 + $0x1c8] sm:$0xff]
  %v999 = vld [vmem:[%s3 + $0x1d0] sm:$0xff]
  %v1000 = vld [vmem:[%s3 + $0x1d8] sm:$0xff]
  %v1001 = vld [vmem:[%s3 + $0x1e0] sm:$0xff]
  %v1002 = vld [vmem:[%s3 + $0x1e8] sm:$0xff]
  %v1003 = vld [vmem:[%s3 + $0x1f0] sm:$0xff]
  %v1004 = vld [vmem:[%s3 + $0x1f8] sm:$0xff]
  %1005 = vmatprep.subr.mxu0 0.0
  %1006 = vmatpush1.msra.mxu0 %v956
  %1007 = vmatprep.subr.mxu0 0.0
  %1008 = vmatpush1.msra.mxu0 %v955
  %1009 = vmatprep.subr.mxu0 0.0
  %1010 = vmatpush1.msra.mxu0 %v954
  %1011 = vmatprep.subr.mxu0 0.0
  %1012 = vmatpush1.msra.mxu0 %v953
  %1013 = vmatprep.subr.mxu0 0.0
  %1014 = vmatpush1.msra.mxu0 %v952
  %1015 = vmatprep.subr.mxu0 0.0
  %1016 = vmatpush1.msra.mxu0 %v951
  %1017 = vmatprep.subr.mxu0 0.0
  %1018 = vmatpush1.msra.mxu0 %v950
  %1019 = vmatprep.subr.mxu0 0.0
  %1020 = vmatpush1.msra.mxu0 %v949
  %1021 = vmatprep.subr.mxu0 0.0
  %1022 = vmatpush1.msra.mxu0 %v948
  %1023 = vmatprep.subr.mxu0 0.0
  %1024 = vmatpush1.msra.mxu0 %v947
  %1025 = vmatprep.subr.mxu0 0.0
  %1026 = vmatpush1.msra.mxu0 %v946
  %1027 = vmatprep.subr.mxu0 0.0
  %1028 = vmatpush1.msra.mxu0 %v945
  %1029 = vmatprep.subr.mxu0 0.0
  %1030 = vmatpush1.msra.mxu0 %v944
  %1031 = vmatprep.subr.mxu0 0.0
  %1032 = vmatpush1.msra.mxu0 %v943
  %1033 = vmatprep.subr.mxu0 0.0
  %1034 = vmatpush1.msra.mxu0 %v942
  %1035 = vmatprep.subr.mxu0 0.0
  %1036 = vmatpush1.msra.mxu0 %v941
  %1037 = vmatprep.subr.mxu0 0.0
  %1038 = vmatpush2.msra.mxu0 %v972
  %1039 = vmatprep.subr.mxu0 0.0
  %1040 = vmatpush2.msra.mxu0 %v971
  %1041 = vmatprep.subr.mxu0 0.0
  %1042 = vmatpush2.msra.mxu0 %v970
  %1043 = vmatprep.subr.mxu0 0.0
  %1044 = vmatpush2.msra.mxu0 %v969
  %1045 = vmatprep.subr.mxu0 0.0
  %1046 = vmatpush2.msra.mxu0 %v968
  %1047 = vmatprep.subr.mxu0 0.0
  %1048 = vmatpush2.msra.mxu0 %v967
  %1049 = vmatprep.subr.mxu0 0.0
  %1050 = vmatpush2.msra.mxu0 %v966
  %1051 = vmatprep.subr.mxu0 0.0
  %1052 = vmatpush2.msra.mxu0 %v965
  %1053 = vmatprep.subr.mxu0 0.0
  %1054 = vmatpush2.msra.mxu0 %v964
  %1055 = vmatprep.subr.mxu0 0.0
  %1056 = vmatpush2.msra.mxu0 %v963
  %1057 = vmatprep.subr.mxu0 0.0
  %1058 = vmatpush2.msra.mxu0 %v962
  %1059 = vmatprep.subr.mxu0 0.0
  %1060 = vmatpush2.msra.mxu0 %v961
  %1061 = vmatprep.subr.mxu0 0.0
  %1062 = vmatpush2.msra.mxu0 %v960
  %1063 = vmatprep.subr.mxu0 0.0
  %1064 = vmatpush2.msra.mxu0 %v959
  %1065 = vmatprep.subr.mxu0 0.0
  %1066 = vmatpush2.msra.mxu0 %v958
  %1067 = vmatprep.subr.mxu0 0.0
  %1068 = vmatpush2.msra.mxu0 %v957
  %1069 = vmatprep.mubr.f32.mxu0 %v938
  %1070 = vmatmul.mubr.f32.gmra.mxu0 %v937
  %v1071 = vpop.f32.mrf.mxu0
  %v1072 = vadd.f32 0.0, %v1071
  %v1073 = vpop.f32.mrf.mxu0
  %1074 = vdwg.mxu0
  %1075 = vmatprep.subr.mxu0 0.0
  %1076 = vmatpush1.msra.mxu0 %v988
  %1077 = vmatprep.subr.mxu0 0.0
  %1078 = vmatpush1.msra.mxu0 %v987
  %1079 = vmatprep.subr.mxu0 0.0
  %1080 = vmatpush1.msra.mxu0 %v986
  %1081 = vmatprep.subr.mxu0 0.0
  %1082 = vmatpush1.msra.mxu0 %v985
  %1083 = vmatprep.subr.mxu0 0.0
  %1084 = vmatpush1.msra.mxu0 %v984
  %1085 = vmatprep.subr.mxu0 0.0
  %1086 = vmatpush1.msra.mxu0 %v983
  %1087 = vmatprep.subr.mxu0 0.0
  %1088 = vmatpush1.msra.mxu0 %v982
  %1089 = vmatprep.subr.mxu0 0.0
  %1090 = vmatpush1.msra.mxu0 %v981
  %1091 = vmatprep.subr.mxu0 0.0
  %1092 = vmatpush1.msra.mxu0 %v980
  %1093 = vmatprep.subr.mxu0 0.0
  %1094 = vmatpush1.msra.mxu0 %v979
  %1095 = vmatprep.subr.mxu0 0.0
  %1096 = vmatpush1.msra.mxu0 %v978
  %1097 = vmatprep.subr.mxu0 0.0
  %1098 = vmatpush1.msra.mxu0 %v977
  %1099 = vmatprep.subr.mxu0 0.0
  %1100 = vmatpush1.msra.mxu0 %v976
  %1101 = vmatprep.subr.mxu0 0.0
  %1102 = vmatpush1.msra.mxu0 %v975
  %1103 = vmatprep.subr.mxu0 0.0
  %1104 = vmatpush1.msra.mxu0 %v974
  %1105 = vmatprep.subr.mxu0 0.0
  %1106 = vmatpush1.msra.mxu0 %v973
  %1107 = vmatprep.subr.mxu0 0.0
  %1108 = vmatpush2.msra.mxu0 %v1004
  %1109 = vmatprep.subr.mxu0 0.0
  %1110 = vmatpush2.msra.mxu0 %v1003
  %1111 = vmatprep.subr.mxu0 0.0
  %1112 = vmatpush2.msra.mxu0 %v1002
  %1113 = vmatprep.subr.mxu0 0.0
  %1114 = vmatpush2.msra.mxu0 %v1001
  %1115 = vmatprep.subr.mxu0 0.0
  %1116 = vmatpush2.msra.mxu0 %v1000
  %1117 = vmatprep.subr.mxu0 0.0
  %1118 = vmatpush2.msra.mxu0 %v999
  %1119 = vmatprep.subr.mxu0 0.0
  %1120 = vmatpush2.msra.mxu0 %v998
  %1121 = vmatprep.subr.mxu0 0.0
  %1122 = vmatpush2.msra.mxu0 %v997
  %1123 = vmatprep.subr.mxu0 0.0
  %1124 = vmatpush2.msra.mxu0 %v996
  %1125 = vmatprep.subr.mxu0 0.0
  %1126 = vmatpush2.msra.mxu0 %v995
  %1127 = vmatprep.subr.mxu0 0.0
  %1128 = vmatpush2.msra.mxu0 %v994
  %1129 = vmatprep.subr.mxu0 0.0
  %1130 = vmatpush2.msra.mxu0 %v993
  %1131 = vmatprep.subr.mxu0 0.0
  %1132 = vmatpush2.msra.mxu0 %v992
  %1133 = vmatprep.subr.mxu0 0.0
  %1134 = vmatpush2.msra.mxu0 %v991
  %1135 = vmatprep.subr.mxu0 0.0
  %1136 = vmatpush2.msra.mxu0 %v990
  %1137 = vmatprep.subr.mxu0 0.0
  %1138 = vmatpush2.msra.mxu0 %v989
  %1139 = vmatprep.mubr.f32.mxu0 %v940
  %1140 = vmatmul.mubr.f32.gmra.mxu0 %v939
  %v1141 = vpop.f32.mrf.mxu0
  %v1142 = vadd.f32 %v1072, %v1141
  %v1143 = vpop.f32.mrf.mxu0
  %1144 = vdwg.mxu0
  %vm1145 = vcmask 254976
  %1146 = vst.msk [vmem:[%s5] sm:$0x3] %vm1145, %v1142
  // Predicated region
  $region18: #{down_sample_block.2} parent=0 // pred_check
    _
  $region19: #{down_sample_block.2} parent=0 // pred_check_branch
    %1148 = sbr.rel (0) target = $region21
  $region20: #{down_sample_block.2} parent=0 // pred_region
    _
  $region21: #{down_sample_block.2} parent=0 // pred_fallthru
    _
  // Predicated region
  $region22: #{down_sample_block.2} parent=0 // pred_check
    _
  $region23: #{down_sample_block.2} parent=0 // pred_check_branch
    %1150 = sbr.rel (0) target = $region25
  $region24: #{down_sample_block.2} parent=0 // pred_region
    _
  $region25: #{down_sample_block.2} parent=0 // pred_fallthru
    _
  // Predicated region
  $region26: #{down_sample_block.2} parent=0 // pred_check
    _
  $region27: #{down_sample_block.2} parent=0 // pred_check_branch
    %1152 = sbr.rel (0) target = $region29
  $region28: #{down_sample_block.2} parent=0 // pred_region
    _
  $region29: #{down_sample_block.2} parent=0 // pred_fallthru
    _
  // Predicated region
  $region30: #{down_sample_block.2} parent=0 // pred_check
    _
  $region31: #{down_sample_block.2} parent=0 // pred_check_branch
    %1154 = sbr.rel (0) target = $region33
  $region32: #{down_sample_block.2} parent=0 // pred_region
    _
  $region33: #{down_sample_block.2} parent=0 // pred_fallthru
    _

// kernel: down_sample_block.3
$region0: #{down_sample_block.3}
  #allocation0 [shape = 'u32[]', space=smem, size = 0x4, offset = 0x4, fixed_abs, tag = 'smem constant byte address 0x4 - core index']
  #allocation1 [shape = 'u32[144,128]{1,0:T(1,128)}', space=vmem, size = 0x12000, scoped, tag = 'internal scratch']
  %s0 = inlined_call_operand.vmem [shape: f32[1,2,32], index: 0, kind: input, shape index: {}]
  %s1 = inlined_call_operand.vmem [shape: f32[2,32], index: 1, kind: input, shape index: {}]
  %s2 = inlined_call_operand.vmem [shape: f32[32,1024], index: 2, kind: input, shape index: {}]
  %s3 = inlined_call_operand.vmem [shape: bf16[2,8,1024], index: 3, kind: input, shape index: {}]
  %s4 = inlined_call_operand.vmem [shape: f32[2,8,256], index: 4, kind: output, shape index: {}]
  %s5 = sld [smem:[#allocation0]]
  $region26: #{down_sample_block.3} parent=0
    _
  %s7 = ssub.s32 1, %s5
  %s8 = scalar_select 0, %s7, %s5
  // Predicated region
  $region2: #{down_sample_block.3} parent=0 // pred_check
    _
  $region3: #{down_sample_block.3} parent=0 // pred_check_branch
    %10 = sbr.rel (0) target = $region5
  $region4: #{down_sample_block.3} parent=0 // pred_region
    _
  $region5: #{down_sample_block.3} parent=0 // pred_fallthru
    _
  // Predicated region
  $region6: #{down_sample_block.3} parent=0 // pred_check
    _
  $region7: #{down_sample_block.3} parent=0 // pred_check_branch
    %12 = sbr.rel (0) target = $region9
  $region8: #{down_sample_block.3} parent=0 // pred_region
    _
  $region9: #{down_sample_block.3} parent=0 // pred_fallthru
    _
  // Predicated region
  $region10: #{down_sample_block.3} parent=0 // pred_check
    _
  $region11: #{down_sample_block.3} parent=0 // pred_check_branch
    %14 = sbr.rel (0) target = $region13
  $region12: #{down_sample_block.3} parent=0 // pred_region
    _
  $region13: #{down_sample_block.3} parent=0 // pred_fallthru
    _
  // Predicated region
  $region14: #{down_sample_block.3} parent=0 // pred_check
    _
  $region15: #{down_sample_block.3} parent=0 // pred_check_branch
    %16 = sbr.rel (0) target = $region17
  $region16: #{down_sample_block.3} parent=0 // pred_region
    _
  $region17: #{down_sample_block.3} parent=0 // pred_fallthru
    _
  %v17 = vld [vmem:[%s0] sm:$0x3]
  %v18 = vadd.f32 %v17, 0.0
  %v19 = vmul.f32 %v18, 0.001953125
  %v20 = vmul.f32 %v19, %v19
  %v22 = vrot.slane %v20, 7
  %v24 = vsub.f32 %v19, %v22
  %v25 = vmax.f32 %v24, 0.0
  %v26 = vld [vmem:[%s1] sm:$0x1]
  %v27 = vadd.f32 %v25, 1e-05
  %v28 = vrsqrt.pop %v27
  %v30 = vrot.slane %v28, 1
  %v32 = vmul.f32 %v26, %v30
  %v33 = vld [vmem:[%s1 + $0x1] sm:$0x1]
  %v34 = vmul.f32 %v19, %v32
  %v35 = vsub.f32 %v33, %v34
  %v37 = vrot.slane %v35, 7
  %vm39 = vcmask 1040384
  %v40 = vsel %vm39, %v32, %v37
  %v41 = vld [vmem:[%s2] sm:$0xff]
  %v42 = vld [vmem:[%s2 + $0x8] sm:$0xff]
  %v43 = vld [vmem:[%s2 + $0x10] sm:$0xff]
  %v44 = vld [vmem:[%s2 + $0x18] sm:$0xff]
  %v45 = vld [vmem:[%s2 + $0x20] sm:$0xff]
  %v46 = vld [vmem:[%s2 + $0x28] sm:$0xff]
  %v47 = vld [vmem:[%s2 + $0x30] sm:$0xff]
  %v48 = vld [vmem:[%s2 + $0x38] sm:$0xff]
  %v49 = vld [vmem:[%s2 + $0x40] sm:$0xff]
  %v50 = vld [vmem:[%s2 + $0x48] sm:$0xff]
  %v51 = vld [vmem:[%s2 + $0x50] sm:$0xff]
  %v52 = vld [vmem:[%s2 + $0x58] sm:$0xff]
  %v53 = vld [vmem:[%s2 + $0x60] sm:$0xff]
  %v54 = vld [vmem:[%s2 + $0x68] sm:$0xff]
  %v55 = vld [vmem:[%s2 + $0x70] sm:$0xff]
  %v56 = vld [vmem:[%s2 + $0x78] sm:$0xff]
  %v57 = vld [vmem:[%s2 + $0x80] sm:$0xff]
  %v58 = vld [vmem:[%s2 + $0x88] sm:$0xff]
  %v59 = vld [vmem:[%s2 + $0x90] sm:$0xff]
  %v60 = vld [vmem:[%s2 + $0x98] sm:$0xff]
  %v61 = vld [vmem:[%s2 + $0xa0] sm:$0xff]
  %v62 = vld [vmem:[%s2 + $0xa8] sm:$0xff]
  %v63 = vld [vmem:[%s2 + $0xb0] sm:$0xff]
  %v64 = vld [vmem:[%s2 + $0xb8] sm:$0xff]
  %v65 = vld [vmem:[%s2 + $0xc0] sm:$0xff]
  %v66 = vld [vmem:[%s2 + $0xc8] sm:$0xff]
  %v67 = vld [vmem:[%s2 + $0xd0] sm:$0xff]
  %v68 = vld [vmem:[%s2 + $0xd8] sm:$0xff]
  %v69 = vld [vmem:[%s2 + $0xe0] sm:$0xff]
  %v70 = vld [vmem:[%s2 + $0xe8] sm:$0xff]
  %v71 = vld [vmem:[%s2 + $0xf0] sm:$0xff]
  %v72 = vld [vmem:[%s2 + $0xf8] sm:$0xff]
  %vm73 = vcmask 261120
  %v75 = vsel %vm73, %v40, 0
  %77 = vmatprep.subr.mxu0 0.0
  %78 = vmatpush1.msra.mxu0 0.0
  %79 = vmatprep.subr.mxu0 0.0
  %80 = vmatpush1.msra.mxu0 0.0
  %81 = vmatprep.subr.mxu0 0.0
  %82 = vmatpush1.msra.mxu0 0.0
  %83 = vmatprep.subr.mxu0 0.0
  %84 = vmatpush1.msra.mxu0 0.0
  %85 = vmatprep.subr.mxu0 0.0
  %86 = vmatpush1.msra.mxu0 0.0
  %87 = vmatprep.subr.mxu0 0.0
  %88 = vmatpush1.msra.mxu0 0.0
  %89 = vmatprep.subr.mxu0 0.0
  %90 = vmatpush1.msra.mxu0 0.0
  %91 = vmatprep.subr.mxu0 0.0
  %92 = vmatpush1.msra.mxu0 0.0
  %93 = vmatprep.subr.mxu0 0.0
  %94 = vmatpush1.msra.mxu0 0.0
  %95 = vmatprep.subr.mxu0 0.0
  %96 = vmatpush1.msra.mxu0 0.0
  %97 = vmatprep.subr.mxu0 0.0
  %98 = vmatpush1.msra.mxu0 0.0
  %99 = vmatprep.subr.mxu0 0.0
  %100 = vmatpush1.msra.mxu0 0.0
  %101 = vmatprep.subr.mxu0 %v66
  %102 = vmatpush1.msra.mxu0 %v65
  %103 = vmatprep.subr.mxu0 %v58
  %104 = vmatpush1.msra.mxu0 %v57
  %105 = vmatprep.subr.mxu0 %v50
  %106 = vmatpush1.msra.mxu0 %v49
  %107 = vmatprep.subr.mxu0 %v42
  %108 = vmatpush1.msra.mxu0 %v41
  %109 = vmatprep.subr.mxu0 0.0
  %110 = vmatpush2.msra.mxu0 0.0
  %111 = vmatprep.subr.mxu0 0.0
  %112 = vmatpush2.msra.mxu0 0.0
  %113 = vmatprep.subr.mxu0 0.0
  %114 = vmatpush2.msra.mxu0 0.0
  %115 = vmatprep.subr.mxu0 0.0
  %116 = vmatpush2.msra.mxu0 0.0
  %117 = vmatprep.subr.mxu0 0.0
  %118 = vmatpush2.msra.mxu0 0.0
  %119 = vmatprep.subr.mxu0 0.0
  %120 = vmatpush2.msra.mxu0 0.0
  %121 = vmatprep.subr.mxu0 0.0
  %122 = vmatpush2.msra.mxu0 0.0
  %123 = vmatprep.subr.mxu0 0.0
  %124 = vmatpush2.msra.mxu0 0.0
  %125 = vmatprep.subr.mxu0 0.0
  %126 = vmatpush2.msra.mxu0 0.0
  %127 = vmatprep.subr.mxu0 0.0
  %128 = vmatpush2.msra.mxu0 0.0
  %129 = vmatprep.subr.mxu0 0.0
  %130 = vmatpush2.msra.mxu0 0.0
  %131 = vmatprep.subr.mxu0 0.0
  %132 = vmatpush2.msra.mxu0 0.0
  %133 = vmatprep.subr.mxu0 0.0
  %134 = vmatpush2.msra.mxu0 0.0
  %135 = vmatprep.subr.mxu0 0.0
  %136 = vmatpush2.msra.mxu0 0.0
  %137 = vmatprep.subr.mxu0 0.0
  %138 = vmatpush2.msra.mxu0 0.0
  %139 = vmatprep.subr.mxu0 0.0
  %140 = vmatpush2.msra.mxu0 0.0
  %141 = vmatprep.mubr.f32.mxu0 0.0
  %142 = vmatmul.mubr.f32.gmra.mxu0 %v75
  %v143 = vpop.f32.mrf.mxu0
  %v144 = vadd.f32 0.0, %v143
  %v145 = vpop.f32.mrf.mxu0
  %v146 = vadd.f32 0.0, %v145
  %147 = vdwg.mxu0
  %148 = vmatprep.subr.mxu0 0.0
  %149 = vmatpush1.msra.mxu0 0.0
  %150 = vmatprep.subr.mxu0 0.0
  %151 = vmatpush1.msra.mxu0 0.0
  %152 = vmatprep.subr.mxu0 0.0
  %153 = vmatpush1.msra.mxu0 0.0
  %154 = vmatprep.subr.mxu0 0.0
  %155 = vmatpush1.msra.mxu0 0.0
  %156 = vmatprep.subr.mxu0 0.0
  %157 = vmatpush1.msra.mxu0 0.0
  %158 = vmatprep.subr.mxu0 0.0
  %159 = vmatpush1.msra.mxu0 0.0
  %160 = vmatprep.subr.mxu0 0.0
  %161 = vmatpush1.msra.mxu0 0.0
  %162 = vmatprep.subr.mxu0 0.0
  %163 = vmatpush1.msra.mxu0 0.0
  %164 = vmatprep.subr.mxu0 0.0
  %165 = vmatpush1.msra.mxu0 0.0
  %166 = vmatprep.subr.mxu0 0.0
  %167 = vmatpush1.msra.mxu0 0.0
  %168 = vmatprep.subr.mxu0 0.0
  %169 = vmatpush1.msra.mxu0 0.0
  %170 = vmatprep.subr.mxu0 0.0
  %171 = vmatpush1.msra.mxu0 0.0
  %172 = vmatprep.subr.mxu0 %v68
  %173 = vmatpush1.msra.mxu0 %v67
  %174 = vmatprep.subr.mxu0 %v60
  %175 = vmatpush1.msra.mxu0 %v59
  %176 = vmatprep.subr.mxu0 %v52
  %177 = vmatpush1.msra.mxu0 %v51
  %178 = vmatprep.subr.mxu0 %v44
  %179 = vmatpush1.msra.mxu0 %v43
  %180 = vmatprep.subr.mxu0 0.0
  %181 = vmatpush2.msra.mxu0 0.0
  %182 = vmatprep.subr.mxu0 0.0
  %183 = vmatpush2.msra.mxu0 0.0
  %184 = vmatprep.subr.mxu0 0.0
  %185 = vmatpush2.msra.mxu0 0.0
  %186 = vmatprep.subr.mxu0 0.0
  %187 = vmatpush2.msra.mxu0 0.0
  %188 = vmatprep.subr.mxu0 0.0
  %189 = vmatpush2.msra.mxu0 0.0
  %190 = vmatprep.subr.mxu0 0.0
  %191 = vmatpush2.msra.mxu0 0.0
  %192 = vmatprep.subr.mxu0 0.0
  %193 = vmatpush2.msra.mxu0 0.0
  %194 = vmatprep.subr.mxu0 0.0
  %195 = vmatpush2.msra.mxu0 0.0
  %196 = vmatprep.subr.mxu0 0.0
  %197 = vmatpush2.msra.mxu0 0.0
  %198 = vmatprep.subr.mxu0 0.0
  %199 = vmatpush2.msra.mxu0 0.0
  %200 = vmatprep.subr.mxu0 0.0
  %201 = vmatpush2.msra.mxu0 0.0
  %202 = vmatprep.subr.mxu0 0.0
  %203 = vmatpush2.msra.mxu0 0.0
  %204 = vmatprep.subr.mxu0 0.0
  %205 = vmatpush2.msra.mxu0 0.0
  %206 = vmatprep.subr.mxu0 0.0
  %207 = vmatpush2.msra.mxu0 0.0
  %208 = vmatprep.subr.mxu0 0.0
  %209 = vmatpush2.msra.mxu0 0.0
  %210 = vmatprep.subr.mxu0 0.0
  %211 = vmatpush2.msra.mxu0 0.0
  %212 = vmatprep.mubr.f32.mxu0 0.0
  %213 = vmatmul.mubr.f32.gmra.mxu0 %v75
  %v214 = vpop.f32.mrf.mxu0
  %v215 = vadd.f32 0.0, %v214
  %v216 = vpop.f32.mrf.mxu0
  %v217 = vadd.f32 0.0, %v216
  %218 = vdwg.mxu0
  %219 = vmatprep.subr.mxu0 0.0
  %220 = vmatpush1.msra.mxu0 0.0
  %221 = vmatprep.subr.mxu0 0.0
  %222 = vmatpush1.msra.mxu0 0.0
  %223 = vmatprep.subr.mxu0 0.0
  %224 = vmatpush1.msra.mxu0 0.0
  %225 = vmatprep.subr.mxu0 0.0
  %226 = vmatpush1.msra.mxu0 0.0
  %227 = vmatprep.subr.mxu0 0.0
  %228 = vmatpush1.msra.mxu0 0.0
  %229 = vmatprep.subr.mxu0 0.0
  %230 = vmatpush1.msra.mxu0 0.0
  %231 = vmatprep.subr.mxu0 0.0
  %232 = vmatpush1.msra.mxu0 0.0
  %233 = vmatprep.subr.mxu0 0.0
  %234 = vmatpush1.msra.mxu0 0.0
  %235 = vmatprep.subr.mxu0 0.0
  %236 = vmatpush1.msra.mxu0 0.0
  %237 = vmatprep.subr.mxu0 0.0
  %238 = vmatpush1.msra.mxu0 0.0
  %239 = vmatprep.subr.mxu0 0.0
  %240 = vmatpush1.msra.mxu0 0.0
  %241 = vmatprep.subr.mxu0 0.0
  %242 = vmatpush1.msra.mxu0 0.0
  %243 = vmatprep.subr.mxu0 %v70
  %244 = vmatpush1.msra.mxu0 %v69
  %245 = vmatprep.subr.mxu0 %v62
  %246 = vmatpush1.msra.mxu0 %v61
  %247 = vmatprep.subr.mxu0 %v54
  %248 = vmatpush1.msra.mxu0 %v53
  %249 = vmatprep.subr.mxu0 %v46
  %250 = vmatpush1.msra.mxu0 %v45
  %251 = vmatprep.subr.mxu0 0.0
  %252 = vmatpush2.msra.mxu0 0.0
  %253 = vmatprep.subr.mxu0 0.0
  %254 = vmatpush2.msra.mxu0 0.0
  %255 = vmatprep.subr.mxu0 0.0
  %256 = vmatpush2.msra.mxu0 0.0
  %257 = vmatprep.subr.mxu0 0.0
  %258 = vmatpush2.msra.mxu0 0.0
  %259 = vmatprep.subr.mxu0 0.0
  %260 = vmatpush2.msra.mxu0 0.0
  %261 = vmatprep.subr.mxu0 0.0
  %262 = vmatpush2.msra.mxu0 0.0
  %263 = vmatprep.subr.mxu0 0.0
  %264 = vmatpush2.msra.mxu0 0.0
  %265 = vmatprep.subr.mxu0 0.0
  %266 = vmatpush2.msra.mxu0 0.0
  %267 = vmatprep.subr.mxu0 0.0
  %268 = vmatpush2.msra.mxu0 0.0
  %269 = vmatprep.subr.mxu0 0.0
  %270 = vmatpush2.msra.mxu0 0.0
  %271 = vmatprep.subr.mxu0 0.0
  %272 = vmatpush2.msra.mxu0 0.0
  %273 = vmatprep.subr.mxu0 0.0
  %274 = vmatpush2.msra.mxu0 0.0
  %275 = vmatprep.subr.mxu0 0.0
  %276 = vmatpush2.msra.mxu0 0.0
  %277 = vmatprep.subr.mxu0 0.0
  %278 = vmatpush2.msra.mxu0 0.0
  %279 = vmatprep.subr.mxu0 0.0
  %280 = vmatpush2.msra.mxu0 0.0
  %281 = vmatprep.subr.mxu0 0.0
  %282 = vmatpush2.msra.mxu0 0.0
  %283 = vmatprep.mubr.f32.mxu0 0.0
  %284 = vmatmul.mubr.f32.gmra.mxu0 %v75
  %v285 = vpop.f32.mrf.mxu0
  %v286 = vadd.f32 0.0, %v285
  %v287 = vpop.f32.mrf.mxu0
  %v288 = vadd.f32 0.0, %v287
  %289 = vdwg.mxu0
  %290 = vmatprep.subr.mxu0 0.0
  %291 = vmatpush1.msra.mxu0 0.0
  %292 = vmatprep.subr.mxu0 0.0
  %293 = vmatpush1.msra.mxu0 0.0
  %294 = vmatprep.subr.mxu0 0.0
  %295 = vmatpush1.msra.mxu0 0.0
  %296 = vmatprep.subr.mxu0 0.0
  %297 = vmatpush1.msra.mxu0 0.0
  %298 = vmatprep.subr.mxu0 0.0
  %299 = vmatpush1.msra.mxu0 0.0
  %300 = vmatprep.subr.mxu0 0.0
  %301 = vmatpush1.msra.mxu0 0.0
  %302 = vmatprep.subr.mxu0 0.0
  %303 = vmatpush1.msra.mxu0 0.0
  %304 = vmatprep.subr.mxu0 0.0
  %305 = vmatpush1.msra.mxu0 0.0
  %306 = vmatprep.subr.mxu0 0.0
  %307 = vmatpush1.msra.mxu0 0.0
  %308 = vmatprep.subr.mxu0 0.0
  %309 = vmatpush1.msra.mxu0 0.0
  %310 = vmatprep.subr.mxu0 0.0
  %311 = vmatpush1.msra.mxu0 0.0
  %312 = vmatprep.subr.mxu0 0.0
  %313 = vmatpush1.msra.mxu0 0.0
  %314 = vmatprep.subr.mxu0 %v72
  %315 = vmatpush1.msra.mxu0 %v71
  %316 = vmatprep.subr.mxu0 %v64
  %317 = vmatpush1.msra.mxu0 %v63
  %318 = vmatprep.subr.mxu0 %v56
  %319 = vmatpush1.msra.mxu0 %v55
  %320 = vmatprep.subr.mxu0 %v48
  %321 = vmatpush1.msra.mxu0 %v47
  %322 = vmatprep.subr.mxu0 0.0
  %323 = vmatpush2.msra.mxu0 0.0
  %324 = vmatprep.subr.mxu0 0.0
  %325 = vmatpush2.msra.mxu0 0.0
  %326 = vmatprep.subr.mxu0 0.0
  %327 = vmatpush2.msra.mxu0 0.0
  %328 = vmatprep.subr.mxu0 0.0
  %329 = vmatpush2.msra.mxu0 0.0
  %330 = vmatprep.subr.mxu0 0.0
  %331 = vmatpush2.msra.mxu0 0.0
  %332 = vmatprep.subr.mxu0 0.0
  %333 = vmatpush2.msra.mxu0 0.0
  %334 = vmatprep.subr.mxu0 0.0
  %335 = vmatpush2.msra.mxu0 0.0
  %336 = vmatprep.subr.mxu0 0.0
  %337 = vmatpush2.msra.mxu0 0.0
  %338 = vmatprep.subr.mxu0 0.0
  %339 = vmatpush2.msra.mxu0 0.0
  %340 = vmatprep.subr.mxu0 0.0
  %341 = vmatpush2.msra.mxu0 0.0
  %342 = vmatprep.subr.mxu0 0.0
  %343 = vmatpush2.msra.mxu0 0.0
  %344 = vmatprep.subr.mxu0 0.0
  %345 = vmatpush2.msra.mxu0 0.0
  %346 = vmatprep.subr.mxu0 0.0
  %347 = vmatpush2.msra.mxu0 0.0
  %348 = vmatprep.subr.mxu0 0.0
  %349 = vmatpush2.msra.mxu0 0.0
  %350 = vmatprep.subr.mxu0 0.0
  %351 = vmatpush2.msra.mxu0 0.0
  %352 = vmatprep.subr.mxu0 0.0
  %353 = vmatpush2.msra.mxu0 0.0
  %354 = vmatprep.mubr.f32.mxu0 0.0
  %355 = vmatmul.mubr.f32.gmra.mxu0 %v75
  %v356 = vpop.f32.mrf.mxu0
  %v357 = vadd.f32 0.0, %v356
  %v358 = vpop.f32.mrf.mxu0
  %v359 = vadd.f32 0.0, %v358
  %360 = vdwg.mxu0
  %v361 = vld [vmem:[%s3] sm:$0xff]
  %v362 = vld [vmem:[%s3 + $0x8] sm:$0xff]
  %v363 = vld [vmem:[%s3 + $0x10] sm:$0xff]
  %v364 = vld [vmem:[%s3 + $0x18] sm:$0xff]
  %v365 = vld [vmem:[%s3 + $0x20] sm:$0xff]
  %v366 = vld [vmem:[%s3 + $0x28] sm:$0xff]
  %v367 = vld [vmem:[%s3 + $0x30] sm:$0xff]
  %v368 = vld [vmem:[%s3 + $0x38] sm:$0xff]
  %v369 = vunpack.c.l.bf16 %v361
  %v370 = vunpack.c.h.bf16 %v361
  %v371 = vunpack.c.l.bf16 %v362
  %v372 = vunpack.c.h.bf16 %v362
  %v373 = vunpack.c.l.bf16 %v363
  %v374 = vunpack.c.h.bf16 %v363
  %v375 = vunpack.c.l.bf16 %v364
  %v376 = vunpack.c.h.bf16 %v364
  %v377 = vunpack.c.l.bf16 %v365
  %v378 = vunpack.c.h.bf16 %v365
  %v379 = vunpack.c.l.bf16 %v366
  %v380 = vunpack.c.h.bf16 %v366
  %v381 = vunpack.c.l.bf16 %v367
  %v382 = vunpack.c.h.bf16 %v367
  %v383 = vunpack.c.l.bf16 %v368
  %v384 = vunpack.c.h.bf16 %v368
  %v385 = vlaneseq
  %v386 = vshrl.u32 %v385, 7
  %v387 = vsub.s32 0, %v386
  %v388 = vrot.slane %v144, %v387
  %v389 = vlaneseq
  %v390 = vshrl.u32 %v389, 7
  %v391 = vsub.s32 0, %v390
  %v392 = vrot.slane %v146, %v391
  %v393 = vlaneseq
  %v394 = vshrl.u32 %v393, 7
  %v395 = vsub.s32 0, %v394
  %v396 = vrot.slane %v215, %v395
  %v397 = vlaneseq
  %v398 = vshrl.u32 %v397, 7
  %v399 = vsub.s32 0, %v398
  %v400 = vrot.slane %v217, %v399
  %v401 = vlaneseq
  %v402 = vshrl.u32 %v401, 7
  %v403 = vsub.s32 0, %v402
  %v404 = vrot.slane %v286, %v403
  %v405 = vlaneseq
  %v406 = vshrl.u32 %v405, 7
  %v407 = vsub.s32 0, %v406
  %v408 = vrot.slane %v288, %v407
  %v409 = vlaneseq
  %v410 = vshrl.u32 %v409, 7
  %v411 = vsub.s32 0, %v410
  %v412 = vrot.slane %v357, %v411
  %v413 = vlaneseq
  %v414 = vshrl.u32 %v413, 7
  %v415 = vsub.s32 0, %v414
  %v416 = vrot.slane %v359, %v415
  %v417 = vmul.f32 %v369, %v388
  %v418 = vmul.f32 %v370, %v392
  %v419 = vmul.f32 %v371, %v396
  %v420 = vmul.f32 %v372, %v400
  %v421 = vmul.f32 %v373, %v404
  %v422 = vmul.f32 %v374, %v408
  %v423 = vmul.f32 %v375, %v412
  %v424 = vmul.f32 %v376, %v416
  %v425 = vmul.f32 %v377, %v388
  %v426 = vmul.f32 %v378, %v392
  %v427 = vmul.f32 %v379, %v396
  %v428 = vmul.f32 %v380, %v400
  %v429 = vmul.f32 %v381, %v404
  %v430 = vmul.f32 %v382, %v408
  %v431 = vmul.f32 %v383, %v412
  %v432 = vmul.f32 %v384, %v416
  %v433 = vlaneseq
  %v434 = vshrl.u32 %v433, 7
  %v435 = vsub.s32 1, %v434
  %v436 = vrot.slane %v144, %v435
  %v437 = vlaneseq
  %v438 = vshrl.u32 %v437, 7
  %v439 = vsub.s32 1, %v438
  %v440 = vrot.slane %v146, %v439
  %v441 = vlaneseq
  %v442 = vshrl.u32 %v441, 7
  %v443 = vsub.s32 1, %v442
  %v444 = vrot.slane %v215, %v443
  %v445 = vlaneseq
  %v446 = vshrl.u32 %v445, 7
  %v447 = vsub.s32 1, %v446
  %v448 = vrot.slane %v217, %v447
  %v449 = vlaneseq
  %v450 = vshrl.u32 %v449, 7
  %v451 = vsub.s32 1, %v450
  %v452 = vrot.slane %v286, %v451
  %v453 = vlaneseq
  %v454 = vshrl.u32 %v453, 7
  %v455 = vsub.s32 1, %v454
  %v456 = vrot.slane %v288, %v455
  %v457 = vlaneseq
  %v458 = vshrl.u32 %v457, 7
  %v459 = vsub.s32 1, %v458
  %v460 = vrot.slane %v357, %v459
  %v461 = vlaneseq
  %v462 = vshrl.u32 %v461, 7
  %v463 = vsub.s32 1, %v462
  %v464 = vrot.slane %v359, %v463
  %v465 = vadd.f32 %v417, %v436
  %v466 = vadd.f32 %v418, %v440
  %v467 = vadd.f32 %v419, %v444
  %v468 = vadd.f32 %v420, %v448
  %v469 = vadd.f32 %v421, %v452
  %v470 = vadd.f32 %v422, %v456
  %v471 = vadd.f32 %v423, %v460
  %v472 = vadd.f32 %v424, %v464
  %v473 = vadd.f32 %v425, %v436
  %v474 = vadd.f32 %v426, %v440
  %v475 = vadd.f32 %v427, %v444
  %v476 = vadd.f32 %v428, %v448
  %v477 = vadd.f32 %v429, %v452
  %v478 = vadd.f32 %v430, %v456
  %v479 = vadd.f32 %v431, %v460
  %v480 = vadd.f32 %v432, %v464
  %v481 = vmax.f32 %v465, 0.0
  %v482 = vmax.f32 %v466, 0.0
  %v483 = vmax.f32 %v467, 0.0
  %v484 = vmax.f32 %v468, 0.0
  %v485 = vmax.f32 %v469, 0.0
  %v486 = vmax.f32 %v470, 0.0
  %v487 = vmax.f32 %v471, 0.0
  %v488 = vmax.f32 %v472, 0.0
  %v489 = vmax.f32 %v473, 0.0
  %v490 = vmax.f32 %v474, 0.0
  %v491 = vmax.f32 %v475, 0.0
  %v492 = vmax.f32 %v476, 0.0
  %v493 = vmax.f32 %v477, 0.0
  %v494 = vmax.f32 %v478, 0.0
  %v495 = vmax.f32 %v479, 0.0
  %v496 = vmax.f32 %v480, 0.0
  %v497 = vmax.f32 %v481, %v485
  %v498 = vmax.f32 %v482, %v486
  %v499 = vmax.f32 %v483, %v487
  %v500 = vmax.f32 %v484, %v488
  %v501 = vmax.f32 %v489, %v493
  %v502 = vmax.f32 %v490, %v494
  %v503 = vmax.f32 %v491, %v495
  %v504 = vmax.f32 %v492, %v496
  %v505 = vmax.f32 %v497, %v499
  %v506 = vmax.f32 %v498, %v500
  %v507 = vmax.f32 %v501, %v503
  %v508 = vmax.f32 %v502, %v504
  %509 = vst [vmem:[%s4] sm:$0xff] %v505
  %510 = vst [vmem:[%s4 + $0x8] sm:$0xff] %v506
  %511 = vst [vmem:[%s4 + $0x10] sm:$0xff] %v507
  %512 = vst [vmem:[%s4 + $0x18] sm:$0xff] %v508
  // Predicated region
  $region18: #{down_sample_block.3} parent=0 // pred_check
    _
  $region19: #{down_sample_block.3} parent=0 // pred_check_branch
    %514 = sbr.rel (0) target = $region21
  $region20: #{down_sample_block.3} parent=0 // pred_region
    _
  $region21: #{down_sample_block.3} parent=0 // pred_fallthru
    _
  // Predicated region
  $region22: #{down_sample_block.3} parent=0 // pred_check
    _
  $region23: #{down_sample_block.3} parent=0 // pred_check_branch
    %516 = sbr.rel (0) target = $region25
  $region24: #{down_sample_block.3} parent=0 // pred_region
    _
  $region25: #{down_sample_block.3} parent=0 // pred_fallthru
    _

</llo_original>
